<compile_context>
chip_gen: v6e
topology: v6e:2x2x1
jax: 0.10.0
libtpu: 0.0.40
codegen_flags: <defaults>
</compile_context>

<pallas_src>
import math
import numpy as np
import jax
import jax.numpy as jnp
from jax.experimental import pallas as pl
from jax.experimental.pallas import tpu as pltpu


# ----------------------------------------------------------------------------
# Fused kernel: wavefront-interleaved multi-layer recurrence, fully unrolled.
# ----------------------------------------------------------------------------
def _make_fused_lstm_kernel(num_layers, seq_len, batch_pad, hidden):
    T, B, H, L = seq_len, batch_pad, hidden, num_layers

    def gate_math(pre, c_prev):
        # Two full-width EUP passes over (B, 4H), sliced afterwards.
        # PyTorch gate order: i, f, g, o.
        sig = jax.nn.sigmoid(pre)
        th = jnp.tanh(pre)
        i_g = sig[:, 0 * H:1 * H]
        f_g = sig[:, 1 * H:2 * H]
        g_g = th[:, 2 * H:3 * H]
        o_g = sig[:, 3 * H:4 * H]
        if c_prev is None:                      # t == 0 peeled: c_prev == 0
            c_new = i_g * g_g
        else:
            c_new = f_g * c_prev + i_g * g_g
        h_new = o_g * jnp.tanh(c_new)
        return h_new, c_new

    def kernel(*refs):
        gates0_ref = refs[0]                    # (T*B, 4H): x @ W_ih0 + b0
        w_hh0_ref = refs[1]                     # (H, 4H)
        upper_refs = refs[2:2 + 3 * (L - 1)]    # (W_ih, W_hh, b) per layer>=1
        out_ref = refs[2 + 3 * (L - 1)]         # (B, H): last layer's h_T

        # Per-layer carried (h, c), kept as values (vregs); None == zeros.
        state = [(None, None)] * L

        # Wavefront schedule: at step s, layer l processes time t = s - l.
        # Layers are visited high->low so state[l-1] still holds its h from
        # step s-1 (== layer l-1's output at time t) when layer l reads it.
        for s in range(T + L - 1):
            for l in reversed(range(L)):
                t = s - l
                if t < 0 or t >= T:
                    continue
                h_prev, c_prev = state[l]
                if l == 0:
                    # bias already folded into the precomputed slab
                    pre = gates0_ref[pl.ds(t * B, B), :]
                    w_hh_ref = w_hh0_ref
                else:
                    w_ih_ref = upper_refs[3 * (l - 1)]
                    w_hh_ref = upper_refs[3 * (l - 1) + 1]
                    b_ref = upper_refs[3 * (l - 1) + 2]
                    h_below = state[l - 1][0]   # layer l-1 output at time t
                    pre = jnp.dot(h_below, w_ih_ref[...],
                                  preferred_element_type=jnp.float32) + b_ref[...]
                if h_prev is not None:          # t == 0 peeled (h_prev == 0)
                    pre = pre + jnp.dot(h_prev, w_hh_ref[...],
                                        preferred_element_type=jnp.float32)
                state[l] = gate_math(pre, c_prev)

        out_ref[...] = state[L - 1][0].astype(out_ref.dtype)

    return kernel


# ----------------------------------------------------------------------------
# Wrapper: layer-0 projection + FC head in XLA, recurrence in one pallas_call.
# ----------------------------------------------------------------------------
def lstm_model_forward(x_bsd, lstm_params, fc_params):
    """x_bsd: (batch, seq, input_size) -> (batch, output_size)."""
    B, T, D = x_bsd.shape
    H = lstm_params[0][1].shape[0]
    L = len(lstm_params)
    w_fc, b_fc = fc_params

    # Pad batch to a sublane multiple (8) so every (B, ·) tile is aligned.
    B_pad = max(8, ((B + 7) // 8) * 8)

    # Layer-0 input projection hoisted to XLA (skinny K=D contraction; keeps
    # only lane-dense data inside the kernel). Combined bias b_ih0+b_hh0 folded.
    w_ih0, w_hh0, b0 = lstm_params[0]
    gates0 = jnp.einsum('btd,dg->tbg', x_bsd.astype(jnp.float32), w_ih0) + b0
    if B_pad != B:
        gates0 = jnp.pad(gates0, ((0, 0), (0, B_pad - B), (0, 0)))
    gates0 = gates0.reshape(T * B_pad, 4 * H)          # rows [t*B : (t+1)*B]

    flat_inputs = [gates0, w_hh0]
    for (w_ih, w_hh, b) in lstm_params[1:]:
        flat_inputs += [w_ih, w_hh, b]

    kernel = _make_fused_lstm_kernel(L, T, B_pad, H)

    # vmem limit sized from the actual footprint (inputs + output + headroom).
    nbytes = sum(int(np.prod(a.shape)) * a.dtype.itemsize for a in flat_inputs)
    nbytes += B_pad * H * 4
    vmem_limit = int(min(max(2 * nbytes + (4 << 20), 32 << 20), 100 << 20))

    h_last = pl.pallas_call(
        kernel,
        out_shape=jax.ShapeDtypeStruct((B_pad, H), jnp.float32),
        in_specs=[pl.BlockSpec(memory_space=pltpu.MemorySpace.VMEM)]
        * len(flat_inputs),
        out_specs=pl.BlockSpec(memory_space=pltpu.MemorySpace.VMEM),
        compiler_params=pltpu.CompilerParams(vmem_limit_bytes=vmem_limit),
    )(*flat_inputs)

    # O=1 Linear head: ~0% MXU utilisation and a 1-lane masked store if done
    # in-kernel, so it runs as a plain XLA op on the kernel's h_T output.
    return h_last[:B] @ w_fc + b_fc


# ----------------------------------------------------------------------------
# Deterministic parameter init (nn.LSTM / nn.Linear shapes; weights stored
# transposed as (in, out) for right-multiplication; b = b_ih + b_hh folded).
# ----------------------------------------------------------------------------
def init_params(key, input_size, hidden_size, num_layers, output_size):
    std = 1.0 / math.sqrt(hidden_size)
    lstm_params = []
    for layer in range(num_layers):
        in_sz = input_size if layer == 0 else hidden_size
        key, k1, k2, k3, k4 = jax.random.split(key, 5)
        w_ih = jax.random.uniform(k1, (in_sz, 4 * hidden_size), jnp.float32, -std, std)
        w_hh = jax.random.uniform(k2, (hidden_size, 4 * hidden_size), jnp.float32, -std, std)
        b_ih = jax.random.uniform(k3, (4 * hidden_size,), jnp.float32, -std, std)
        b_hh = jax.random.uniform(k4, (4 * hidden_size,), jnp.float32, -std, std)
        lstm_params.append((w_ih, w_hh, (b_ih + b_hh).reshape(1, 4 * hidden_size)))
    key, kw, kb = jax.random.split(key, 3)
    w_fc = jax.random.uniform(kw, (hidden_size, output_size), jnp.float32, -std, std)
    b_fc = jax.random.uniform(kb, (1, output_size), jnp.float32, -std, std)
    return lstm_params, (w_fc, b_fc)


# ----------------------------------------------------------------------------
# Pure-JAX reference (same math) for a correctness sanity check.
# ----------------------------------------------------------------------------
def reference_forward(x_bsd, lstm_params, fc_params):
    x = jnp.transpose(x_bsd, (1, 0, 2))  # (T, B, D)
    for (w_ih, w_hh, b) in lstm_params:
        B = x.shape[1]
        H = w_hh.shape[0]
        h0 = jnp.zeros((B, H), jnp.float32)
        c0 = jnp.zeros((B, H), jnp.float32)

        def step(carry, x_t):
            h, c = carry
            gates = x_t @ w_ih + h @ w_hh + b
            i = jax.nn.sigmoid(gates[:, 0 * H:1 * H])
            f = jax.nn.sigmoid(gates[:, 1 * H:2 * H])
            g = jnp.tanh(gates[:, 2 * H:3 * H])
            o = jax.nn.sigmoid(gates[:, 3 * H:4 * H])
            c_new = f * c + i * g
            h_new = o * jnp.tanh(c_new)
            return (h_new, c_new), h_new

        _, x = jax.lax.scan(step, (h0, c0), x)
    w_fc, b_fc = fc_params
    return x[-1] @ w_fc + b_fc


if __name__ == "__main__":
    batch, seq_len = 2, 8
    input_size, hidden_size, num_layers, output_size = 4, 32, 2, 1

    key = jax.random.PRNGKey(0)
    key, kx = jax.random.split(key)
    x = jax.random.normal(kx, (batch, seq_len, input_size), jnp.float32)

    lstm_params, fc_params = init_params(
        key, input_size, hidden_size, num_layers, output_size)

    out = lstm_model_forward(x, lstm_params, fc_params)
    out = jax.block_until_ready(out)

    ref = jax.block_until_ready(reference_forward(x, lstm_params, fc_params))
    assert out.shape == (batch, output_size), out.shape
    np.testing.assert_allclose(np.asarray(out), np.asarray(ref),
                               rtol=1e-3, atol=1e-3)
    print("KERNEL_OK")
</pallas_src>

<mosaic_0001>
module attributes {stable_mosaic.version = 11 : i64} {
  func.func @kernel(%arg0: memref<64x128xf32, #tpu.memory_space<vmem>>, %arg1: memref<32x128xf32, #tpu.memory_space<vmem>>, %arg2: memref<32x128xf32, #tpu.memory_space<vmem>>, %arg3: memref<32x128xf32, #tpu.memory_space<vmem>>, %arg4: memref<1x128xf32, #tpu.memory_space<vmem>>, %arg5: memref<8x32xf32, #tpu.memory_space<vmem>>) attributes {dimension_semantics = [], scalar_prefetch = 0 : i64, scratch_operands = 0 : i64, tpu.core_type = #tpu.core_type<tc>} {
    %c0 = arith.constant 0 : index
    %c0_0 = arith.constant 0 : index
    %0 = vector.load %arg0[%c0, %c0_0] : memref<64x128xf32, #tpu.memory_space<vmem>>, vector<8x128xf32>
    %1 = arith.negf %0 : vector<8x128xf32>
    %2 = math.exp %1 : vector<8x128xf32>
    %cst = arith.constant 1.000000e+00 : f32
    %3 = vector.broadcast %cst : f32 to vector<8x128xf32>
    %4 = arith.addf %3, %2 : vector<8x128xf32>
    %5 = arith.divf %3, %4 : vector<8x128xf32>
    %6 = math.tanh %0 : vector<8x128xf32>
    %7 = vector.extract_strided_slice %5 {offsets = [0, 0], sizes = [8, 32], strides = [1, 1]} : vector<8x128xf32> to vector<8x32xf32>
    %8 = vector.extract_strided_slice %6 {offsets = [0, 64], sizes = [8, 32], strides = [1, 1]} : vector<8x128xf32> to vector<8x32xf32>
    %9 = vector.extract_strided_slice %5 {offsets = [0, 96], sizes = [8, 32], strides = [1, 1]} : vector<8x128xf32> to vector<8x32xf32>
    %10 = arith.mulf %7, %8 : vector<8x32xf32>
    %11 = math.tanh %10 : vector<8x32xf32>
    %12 = arith.mulf %9, %11 : vector<8x32xf32>
    %c0_1 = arith.constant 0 : index
    %c0_2 = arith.constant 0 : index
    %13 = vector.load %arg2[%c0_1, %c0_2] : memref<32x128xf32, #tpu.memory_space<vmem>>, vector<32x128xf32>
    %cst_3 = arith.constant dense<0.000000e+00> : vector<8x128xf32>
    %14 = tpu.matmul %12, %13, %cst_3 {dimension_numbers = #tpu.dot_dimension_numbers<[1], [0], [0], [1], [0, 0, 1, 1], [], []>} : vector<8x32xf32>, vector<32x128xf32>, vector<8x128xf32> -> vector<8x128xf32>
    %c0_4 = arith.constant 0 : index
    %c0_5 = arith.constant 0 : index
    %15 = vector.load %arg4[%c0_4, %c0_5] : memref<1x128xf32, #tpu.memory_space<vmem>>, vector<1x128xf32>
    %16 = vector.broadcast %15 : vector<1x128xf32> to vector<8x128xf32>
    %17 = arith.addf %14, %16 : vector<8x128xf32>
    %18 = arith.negf %17 : vector<8x128xf32>
    %19 = math.exp %18 : vector<8x128xf32>
    %cst_6 = arith.constant 1.000000e+00 : f32
    %20 = vector.broadcast %cst_6 : f32 to vector<8x128xf32>
    %21 = arith.addf %20, %19 : vector<8x128xf32>
    %22 = arith.divf %20, %21 : vector<8x128xf32>
    %23 = math.tanh %17 : vector<8x128xf32>
    %24 = vector.extract_strided_slice %22 {offsets = [0, 0], sizes = [8, 32], strides = [1, 1]} : vector<8x128xf32> to vector<8x32xf32>
    %25 = vector.extract_strided_slice %23 {offsets = [0, 64], sizes = [8, 32], strides = [1, 1]} : vector<8x128xf32> to vector<8x32xf32>
    %26 = vector.extract_strided_slice %22 {offsets = [0, 96], sizes = [8, 32], strides = [1, 1]} : vector<8x128xf32> to vector<8x32xf32>
    %27 = arith.mulf %24, %25 : vector<8x32xf32>
    %28 = math.tanh %27 : vector<8x32xf32>
    %29 = arith.mulf %26, %28 : vector<8x32xf32>
    %c8 = arith.constant 8 : index
    %c0_7 = arith.constant 0 : index
    %30 = vector.load %arg0[%c8, %c0_7] : memref<64x128xf32, #tpu.memory_space<vmem>>, vector<8x128xf32>
    %c0_8 = arith.constant 0 : index
    %c0_9 = arith.constant 0 : index
    %31 = vector.load %arg1[%c0_8, %c0_9] : memref<32x128xf32, #tpu.memory_space<vmem>>, vector<32x128xf32>
    %cst_10 = arith.constant dense<0.000000e+00> : vector<8x128xf32>
    %32 = tpu.matmul %12, %31, %cst_10 {dimension_numbers = #tpu.dot_dimension_numbers<[1], [0], [0], [1], [0, 0, 1, 1], [], []>} : vector<8x32xf32>, vector<32x128xf32>, vector<8x128xf32> -> vector<8x128xf32>
    %33 = arith.addf %30, %32 : vector<8x128xf32>
    %34 = arith.negf %33 : vector<8x128xf32>
    %35 = math.exp %34 : vector<8x128xf32>
    %cst_11 = arith.constant 1.000000e+00 : f32
    %36 = vector.broadcast %cst_11 : f32 to vector<8x128xf32>
    %37 = arith.addf %36, %35 : vector<8x128xf32>
    %38 = arith.divf %36, %37 : vector<8x128xf32>
    %39 = math.tanh %33 : vector<8x128xf32>
    %40 = vector.extract_strided_slice %38 {offsets = [0, 0], sizes = [8, 32], strides = [1, 1]} : vector<8x128xf32> to vector<8x32xf32>
    %41 = vector.extract_strided_slice %38 {offsets = [0, 32], sizes = [8, 32], strides = [1, 1]} : vector<8x128xf32> to vector<8x32xf32>
    %42 = vector.extract_strided_slice %39 {offsets = [0, 64], sizes = [8, 32], strides = [1, 1]} : vector<8x128xf32> to vector<8x32xf32>
    %43 = vector.extract_strided_slice %38 {offsets = [0, 96], sizes = [8, 32], strides = [1, 1]} : vector<8x128xf32> to vector<8x32xf32>
    %44 = arith.mulf %41, %10 : vector<8x32xf32>
    %45 = arith.mulf %40, %42 : vector<8x32xf32>
    %46 = arith.addf %44, %45 : vector<8x32xf32>
    %47 = math.tanh %46 : vector<8x32xf32>
    %48 = arith.mulf %43, %47 : vector<8x32xf32>
    %c0_12 = arith.constant 0 : index
    %c0_13 = arith.constant 0 : index
    %49 = vector.load %arg2[%c0_12, %c0_13] : memref<32x128xf32, #tpu.memory_space<vmem>>, vector<32x128xf32>
    %cst_14 = arith.constant dense<0.000000e+00> : vector<8x128xf32>
    %50 = tpu.matmul %48, %49, %cst_14 {dimension_numbers = #tpu.dot_dimension_numbers<[1], [0], [0], [1], [0, 0, 1, 1], [], []>} : vector<8x32xf32>, vector<32x128xf32>, vector<8x128xf32> -> vector<8x128xf32>
    %c0_15 = arith.constant 0 : index
    %c0_16 = arith.constant 0 : index
    %51 = vector.load %arg4[%c0_15, %c0_16] : memref<1x128xf32, #tpu.memory_space<vmem>>, vector<1x128xf32>
    %52 = vector.broadcast %51 : vector<1x128xf32> to vector<8x128xf32>
    %53 = arith.addf %50, %52 : vector<8x128xf32>
    %c0_17 = arith.constant 0 : index
    %c0_18 = arith.constant 0 : index
    %54 = vector.load %arg3[%c0_17, %c0_18] : memref<32x128xf32, #tpu.memory_space<vmem>>, vector<32x128xf32>
    %cst_19 = arith.constant dense<0.000000e+00> : vector<8x128xf32>
    %55 = tpu.matmul %29, %54, %cst_19 {dimension_numbers = #tpu.dot_dimension_numbers<[1], [0], [0], [1], [0, 0, 1, 1], [], []>} : vector<8x32xf32>, vector<32x128xf32>, vector<8x128xf32> -> vector<8x128xf32>
    %56 = arith.addf %53, %55 : vector<8x128xf32>
    %57 = arith.negf %56 : vector<8x128xf32>
    %58 = math.exp %57 : vector<8x128xf32>
    %cst_20 = arith.constant 1.000000e+00 : f32
    %59 = vector.broadcast %cst_20 : f32 to vector<8x128xf32>
    %60 = arith.addf %59, %58 : vector<8x128xf32>
    %61 = arith.divf %59, %60 : vector<8x128xf32>
    %62 = math.tanh %56 : vector<8x128xf32>
    %63 = vector.extract_strided_slice %61 {offsets = [0, 0], sizes = [8, 32], strides = [1, 1]} : vector<8x128xf32> to vector<8x32xf32>
    %64 = vector.extract_strided_slice %61 {offsets = [0, 32], sizes = [8, 32], strides = [1, 1]} : vector<8x128xf32> to vector<8x32xf32>
    %65 = vector.extract_strided_slice %62 {offsets = [0, 64], sizes = [8, 32], strides = [1, 1]} : vector<8x128xf32> to vector<8x32xf32>
    %66 = vector.extract_strided_slice %61 {offsets = [0, 96], sizes = [8, 32], strides = [1, 1]} : vector<8x128xf32> to vector<8x32xf32>
    %67 = arith.mulf %64, %27 : vector<8x32xf32>
    %68 = arith.mulf %63, %65 : vector<8x32xf32>
    %69 = arith.addf %67, %68 : vector<8x32xf32>
    %70 = math.tanh %69 : vector<8x32xf32>
    %71 = arith.mulf %66, %70 : vector<8x32xf32>
    %c16 = arith.constant 16 : index
    %c0_21 = arith.constant 0 : index
    %72 = vector.load %arg0[%c16, %c0_21] : memref<64x128xf32, #tpu.memory_space<vmem>>, vector<8x128xf32>
    %c0_22 = arith.constant 0 : index
    %c0_23 = arith.constant 0 : index
    %73 = vector.load %arg1[%c0_22, %c0_23] : memref<32x128xf32, #tpu.memory_space<vmem>>, vector<32x128xf32>
    %cst_24 = arith.constant dense<0.000000e+00> : vector<8x128xf32>
    %74 = tpu.matmul %48, %73, %cst_24 {dimension_numbers = #tpu.dot_dimension_numbers<[1], [0], [0], [1], [0, 0, 1, 1], [], []>} : vector<8x32xf32>, vector<32x128xf32>, vector<8x128xf32> -> vector<8x128xf32>
    %75 = arith.addf %72, %74 : vector<8x128xf32>
    %76 = arith.negf %75 : vector<8x128xf32>
    %77 = math.exp %76 : vector<8x128xf32>
    %cst_25 = arith.constant 1.000000e+00 : f32
    %78 = vector.broadcast %cst_25 : f32 to vector<8x128xf32>
    %79 = arith.addf %78, %77 : vector<8x128xf32>
    %80 = arith.divf %78, %79 : vector<8x128xf32>
    %81 = math.tanh %75 : vector<8x128xf32>
    %82 = vector.extract_strided_slice %80 {offsets = [0, 0], sizes = [8, 32], strides = [1, 1]} : vector<8x128xf32> to vector<8x32xf32>
    %83 = vector.extract_strided_slice %80 {offsets = [0, 32], sizes = [8, 32], strides = [1, 1]} : vector<8x128xf32> to vector<8x32xf32>
    %84 = vector.extract_strided_slice %81 {offsets = [0, 64], sizes = [8, 32], strides = [1, 1]} : vector<8x128xf32> to vector<8x32xf32>
    %85 = vector.extract_strided_slice %80 {offsets = [0, 96], sizes = [8, 32], strides = [1, 1]} : vector<8x128xf32> to vector<8x32xf32>
    %86 = arith.mulf %83, %46 : vector<8x32xf32>
    %87 = arith.mulf %82, %84 : vector<8x32xf32>
    %88 = arith.addf %86, %87 : vector<8x32xf32>
    %89 = math.tanh %88 : vector<8x32xf32>
    %90 = arith.mulf %85, %89 : vector<8x32xf32>
    %c0_26 = arith.constant 0 : index
    %c0_27 = arith.constant 0 : index
    %91 = vector.load %arg2[%c0_26, %c0_27] : memref<32x128xf32, #tpu.memory_space<vmem>>, vector<32x128xf32>
    %cst_28 = arith.constant dense<0.000000e+00> : vector<8x128xf32>
    %92 = tpu.matmul %90, %91, %cst_28 {dimension_numbers = #tpu.dot_dimension_numbers<[1], [0], [0], [1], [0, 0, 1, 1], [], []>} : vector<8x32xf32>, vector<32x128xf32>, vector<8x128xf32> -> vector<8x128xf32>
    %c0_29 = arith.constant 0 : index
    %c0_30 = arith.constant 0 : index
    %93 = vector.load %arg4[%c0_29, %c0_30] : memref<1x128xf32, #tpu.memory_space<vmem>>, vector<1x128xf32>
    %94 = vector.broadcast %93 : vector<1x128xf32> to vector<8x128xf32>
    %95 = arith.addf %92, %94 : vector<8x128xf32>
    %c0_31 = arith.constant 0 : index
    %c0_32 = arith.constant 0 : index
    %96 = vector.load %arg3[%c0_31, %c0_32] : memref<32x128xf32, #tpu.memory_space<vmem>>, vector<32x128xf32>
    %cst_33 = arith.constant dense<0.000000e+00> : vector<8x128xf32>
    %97 = tpu.matmul %71, %96, %cst_33 {dimension_numbers = #tpu.dot_dimension_numbers<[1], [0], [0], [1], [0, 0, 1, 1], [], []>} : vector<8x32xf32>, vector<32x128xf32>, vector<8x128xf32> -> vector<8x128xf32>
    %98 = arith.addf %95, %97 : vector<8x128xf32>
    %99 = arith.negf %98 : vector<8x128xf32>
    %100 = math.exp %99 : vector<8x128xf32>
    %cst_34 = arith.constant 1.000000e+00 : f32
    %101 = vector.broadcast %cst_34 : f32 to vector<8x128xf32>
    %102 = arith.addf %101, %100 : vector<8x128xf32>
    %103 = arith.divf %101, %102 : vector<8x128xf32>
    %104 = math.tanh %98 : vector<8x128xf32>
    %105 = vector.extract_strided_slice %103 {offsets = [0, 0], sizes = [8, 32], strides = [1, 1]} : vector<8x128xf32> to vector<8x32xf32>
    %106 = vector.extract_strided_slice %103 {offsets = [0, 32], sizes = [8, 32], strides = [1, 1]} : vector<8x128xf32> to vector<8x32xf32>
    %107 = vector.extract_strided_slice %104 {offsets = [0, 64], sizes = [8, 32], strides = [1, 1]} : vector<8x128xf32> to vector<8x32xf32>
    %108 = vector.extract_strided_slice %103 {offsets = [0, 96], sizes = [8, 32], strides = [1, 1]} : vector<8x128xf32> to vector<8x32xf32>
    %109 = arith.mulf %106, %69 : vector<8x32xf32>
    %110 = arith.mulf %105, %107 : vector<8x32xf32>
    %111 = arith.addf %109, %110 : vector<8x32xf32>
    %112 = math.tanh %111 : vector<8x32xf32>
    %113 = arith.mulf %108, %112 : vector<8x32xf32>
    %c24 = arith.constant 24 : index
    %c0_35 = arith.constant 0 : index
    %114 = vector.load %arg0[%c24, %c0_35] : memref<64x128xf32, #tpu.memory_space<vmem>>, vector<8x128xf32>
    %c0_36 = arith.constant 0 : index
    %c0_37 = arith.constant 0 : index
    %115 = vector.load %arg1[%c0_36, %c0_37] : memref<32x128xf32, #tpu.memory_space<vmem>>, vector<32x128xf32>
    %cst_38 = arith.constant dense<0.000000e+00> : vector<8x128xf32>
    %116 = tpu.matmul %90, %115, %cst_38 {dimension_numbers = #tpu.dot_dimension_numbers<[1], [0], [0], [1], [0, 0, 1, 1], [], []>} : vector<8x32xf32>, vector<32x128xf32>, vector<8x128xf32> -> vector<8x128xf32>
    %117 = arith.addf %114, %116 : vector<8x128xf32>
    %118 = arith.negf %117 : vector<8x128xf32>
    %119 = math.exp %118 : vector<8x128xf32>
    %cst_39 = arith.constant 1.000000e+00 : f32
    %120 = vector.broadcast %cst_39 : f32 to vector<8x128xf32>
    %121 = arith.addf %120, %119 : vector<8x128xf32>
    %122 = arith.divf %120, %121 : vector<8x128xf32>
    %123 = math.tanh %117 : vector<8x128xf32>
    %124 = vector.extract_strided_slice %122 {offsets = [0, 0], sizes = [8, 32], strides = [1, 1]} : vector<8x128xf32> to vector<8x32xf32>
    %125 = vector.extract_strided_slice %122 {offsets = [0, 32], sizes = [8, 32], strides = [1, 1]} : vector<8x128xf32> to vector<8x32xf32>
    %126 = vector.extract_strided_slice %123 {offsets = [0, 64], sizes = [8, 32], strides = [1, 1]} : vector<8x128xf32> to vector<8x32xf32>
    %127 = vector.extract_strided_slice %122 {offsets = [0, 96], sizes = [8, 32], strides = [1, 1]} : vector<8x128xf32> to vector<8x32xf32>
    %128 = arith.mulf %125, %88 : vector<8x32xf32>
    %129 = arith.mulf %124, %126 : vector<8x32xf32>
    %130 = arith.addf %128, %129 : vector<8x32xf32>
    %131 = math.tanh %130 : vector<8x32xf32>
    %132 = arith.mulf %127, %131 : vector<8x32xf32>
    %c0_40 = arith.constant 0 : index
    %c0_41 = arith.constant 0 : index
    %133 = vector.load %arg2[%c0_40, %c0_41] : memref<32x128xf32, #tpu.memory_space<vmem>>, vector<32x128xf32>
    %cst_42 = arith.constant dense<0.000000e+00> : vector<8x128xf32>
    %134 = tpu.matmul %132, %133, %cst_42 {dimension_numbers = #tpu.dot_dimension_numbers<[1], [0], [0], [1], [0, 0, 1, 1], [], []>} : vector<8x32xf32>, vector<32x128xf32>, vector<8x128xf32> -> vector<8x128xf32>
    %c0_43 = arith.constant 0 : index
    %c0_44 = arith.constant 0 : index
    %135 = vector.load %arg4[%c0_43, %c0_44] : memref<1x128xf32, #tpu.memory_space<vmem>>, vector<1x128xf32>
    %136 = vector.broadcast %135 : vector<1x128xf32> to vector<8x128xf32>
    %137 = arith.addf %134, %136 : vector<8x128xf32>
    %c0_45 = arith.constant 0 : index
    %c0_46 = arith.constant 0 : index
    %138 = vector.load %arg3[%c0_45, %c0_46] : memref<32x128xf32, #tpu.memory_space<vmem>>, vector<32x128xf32>
    %cst_47 = arith.constant dense<0.000000e+00> : vector<8x128xf32>
    %139 = tpu.matmul %113, %138, %cst_47 {dimension_numbers = #tpu.dot_dimension_numbers<[1], [0], [0], [1], [0, 0, 1, 1], [], []>} : vector<8x32xf32>, vector<32x128xf32>, vector<8x128xf32> -> vector<8x128xf32>
    %140 = arith.addf %137, %139 : vector<8x128xf32>
    %141 = arith.negf %140 : vector<8x128xf32>
    %142 = math.exp %141 : vector<8x128xf32>
    %cst_48 = arith.constant 1.000000e+00 : f32
    %143 = vector.broadcast %cst_48 : f32 to vector<8x128xf32>
    %144 = arith.addf %143, %142 : vector<8x128xf32>
    %145 = arith.divf %143, %144 : vector<8x128xf32>
    %146 = math.tanh %140 : vector<8x128xf32>
    %147 = vector.extract_strided_slice %145 {offsets = [0, 0], sizes = [8, 32], strides = [1, 1]} : vector<8x128xf32> to vector<8x32xf32>
    %148 = vector.extract_strided_slice %145 {offsets = [0, 32], sizes = [8, 32], strides = [1, 1]} : vector<8x128xf32> to vector<8x32xf32>
    %149 = vector.extract_strided_slice %146 {offsets = [0, 64], sizes = [8, 32], strides = [1, 1]} : vector<8x128xf32> to vector<8x32xf32>
    %150 = vector.extract_strided_slice %145 {offsets = [0, 96], sizes = [8, 32], strides = [1, 1]} : vector<8x128xf32> to vector<8x32xf32>
    %151 = arith.mulf %148, %111 : vector<8x32xf32>
    %152 = arith.mulf %147, %149 : vector<8x32xf32>
    %153 = arith.addf %151, %152 : vector<8x32xf32>
    %154 = math.tanh %153 : vector<8x32xf32>
    %155 = arith.mulf %150, %154 : vector<8x32xf32>
    %c32 = arith.constant 32 : index
    %c0_49 = arith.constant 0 : index
    %156 = vector.load %arg0[%c32, %c0_49] : memref<64x128xf32, #tpu.memory_space<vmem>>, vector<8x128xf32>
    %c0_50 = arith.constant 0 : index
    %c0_51 = arith.constant 0 : index
    %157 = vector.load %arg1[%c0_50, %c0_51] : memref<32x128xf32, #tpu.memory_space<vmem>>, vector<32x128xf32>
    %cst_52 = arith.constant dense<0.000000e+00> : vector<8x128xf32>
    %158 = tpu.matmul %132, %157, %cst_52 {dimension_numbers = #tpu.dot_dimension_numbers<[1], [0], [0], [1], [0, 0, 1, 1], [], []>} : vector<8x32xf32>, vector<32x128xf32>, vector<8x128xf32> -> vector<8x128xf32>
    %159 = arith.addf %156, %158 : vector<8x128xf32>
    %160 = arith.negf %159 : vector<8x128xf32>
    %161 = math.exp %160 : vector<8x128xf32>
    %cst_53 = arith.constant 1.000000e+00 : f32
    %162 = vector.broadcast %cst_53 : f32 to vector<8x128xf32>
    %163 = arith.addf %162, %161 : vector<8x128xf32>
    %164 = arith.divf %162, %163 : vector<8x128xf32>
    %165 = math.tanh %159 : vector<8x128xf32>
    %166 = vector.extract_strided_slice %164 {offsets = [0, 0], sizes = [8, 32], strides = [1, 1]} : vector<8x128xf32> to vector<8x32xf32>
    %167 = vector.extract_strided_slice %164 {offsets = [0, 32], sizes = [8, 32], strides = [1, 1]} : vector<8x128xf32> to vector<8x32xf32>
    %168 = vector.extract_strided_slice %165 {offsets = [0, 64], sizes = [8, 32], strides = [1, 1]} : vector<8x128xf32> to vector<8x32xf32>
    %169 = vector.extract_strided_slice %164 {offsets = [0, 96], sizes = [8, 32], strides = [1, 1]} : vector<8x128xf32> to vector<8x32xf32>
    %170 = arith.mulf %167, %130 : vector<8x32xf32>
    %171 = arith.mulf %166, %168 : vector<8x32xf32>
    %172 = arith.addf %170, %171 : vector<8x32xf32>
    %173 = math.tanh %172 : vector<8x32xf32>
    %174 = arith.mulf %169, %173 : vector<8x32xf32>
    %c0_54 = arith.constant 0 : index
    %c0_55 = arith.constant 0 : index
    %175 = vector.load %arg2[%c0_54, %c0_55] : memref<32x128xf32, #tpu.memory_space<vmem>>, vector<32x128xf32>
    %cst_56 = arith.constant dense<0.000000e+00> : vector<8x128xf32>
    %176 = tpu.matmul %174, %175, %cst_56 {dimension_numbers = #tpu.dot_dimension_numbers<[1], [0], [0], [1], [0, 0, 1, 1], [], []>} : vector<8x32xf32>, vector<32x128xf32>, vector<8x128xf32> -> vector<8x128xf32>
    %c0_57 = arith.constant 0 : index
    %c0_58 = arith.constant 0 : index
    %177 = vector.load %arg4[%c0_57, %c0_58] : memref<1x128xf32, #tpu.memory_space<vmem>>, vector<1x128xf32>
    %178 = vector.broadcast %177 : vector<1x128xf32> to vector<8x128xf32>
    %179 = arith.addf %176, %178 : vector<8x128xf32>
    %c0_59 = arith.constant 0 : index
    %c0_60 = arith.constant 0 : index
    %180 = vector.load %arg3[%c0_59, %c0_60] : memref<32x128xf32, #tpu.memory_space<vmem>>, vector<32x128xf32>
    %cst_61 = arith.constant dense<0.000000e+00> : vector<8x128xf32>
    %181 = tpu.matmul %155, %180, %cst_61 {dimension_numbers = #tpu.dot_dimension_numbers<[1], [0], [0], [1], [0, 0, 1, 1], [], []>} : vector<8x32xf32>, vector<32x128xf32>, vector<8x128xf32> -> vector<8x128xf32>
    %182 = arith.addf %179, %181 : vector<8x128xf32>
    %183 = arith.negf %182 : vector<8x128xf32>
    %184 = math.exp %183 : vector<8x128xf32>
    %cst_62 = arith.constant 1.000000e+00 : f32
    %185 = vector.broadcast %cst_62 : f32 to vector<8x128xf32>
    %186 = arith.addf %185, %184 : vector<8x128xf32>
    %187 = arith.divf %185, %186 : vector<8x128xf32>
    %188 = math.tanh %182 : vector<8x128xf32>
    %189 = vector.extract_strided_slice %187 {offsets = [0, 0], sizes = [8, 32], strides = [1, 1]} : vector<8x128xf32> to vector<8x32xf32>
    %190 = vector.extract_strided_slice %187 {offsets = [0, 32], sizes = [8, 32], strides = [1, 1]} : vector<8x128xf32> to vector<8x32xf32>
    %191 = vector.extract_strided_slice %188 {offsets = [0, 64], sizes = [8, 32], strides = [1, 1]} : vector<8x128xf32> to vector<8x32xf32>
    %192 = vector.extract_strided_slice %187 {offsets = [0, 96], sizes = [8, 32], strides = [1, 1]} : vector<8x128xf32> to vector<8x32xf32>
    %193 = arith.mulf %190, %153 : vector<8x32xf32>
    %194 = arith.mulf %189, %191 : vector<8x32xf32>
    %195 = arith.addf %193, %194 : vector<8x32xf32>
    %196 = math.tanh %195 : vector<8x32xf32>
    %197 = arith.mulf %192, %196 : vector<8x32xf32>
    %c40 = arith.constant 40 : index
    %c0_63 = arith.constant 0 : index
    %198 = vector.load %arg0[%c40, %c0_63] : memref<64x128xf32, #tpu.memory_space<vmem>>, vector<8x128xf32>
    %c0_64 = arith.constant 0 : index
    %c0_65 = arith.constant 0 : index
    %199 = vector.load %arg1[%c0_64, %c0_65] : memref<32x128xf32, #tpu.memory_space<vmem>>, vector<32x128xf32>
    %cst_66 = arith.constant dense<0.000000e+00> : vector<8x128xf32>
    %200 = tpu.matmul %174, %199, %cst_66 {dimension_numbers = #tpu.dot_dimension_numbers<[1], [0], [0], [1], [0, 0, 1, 1], [], []>} : vector<8x32xf32>, vector<32x128xf32>, vector<8x128xf32> -> vector<8x128xf32>
    %201 = arith.addf %198, %200 : vector<8x128xf32>
    %202 = arith.negf %201 : vector<8x128xf32>
    %203 = math.exp %202 : vector<8x128xf32>
    %cst_67 = arith.constant 1.000000e+00 : f32
    %204 = vector.broadcast %cst_67 : f32 to vector<8x128xf32>
    %205 = arith.addf %204, %203 : vector<8x128xf32>
    %206 = arith.divf %204, %205 : vector<8x128xf32>
    %207 = math.tanh %201 : vector<8x128xf32>
    %208 = vector.extract_strided_slice %206 {offsets = [0, 0], sizes = [8, 32], strides = [1, 1]} : vector<8x128xf32> to vector<8x32xf32>
    %209 = vector.extract_strided_slice %206 {offsets = [0, 32], sizes = [8, 32], strides = [1, 1]} : vector<8x128xf32> to vector<8x32xf32>
    %210 = vector.extract_strided_slice %207 {offsets = [0, 64], sizes = [8, 32], strides = [1, 1]} : vector<8x128xf32> to vector<8x32xf32>
    %211 = vector.extract_strided_slice %206 {offsets = [0, 96], sizes = [8, 32], strides = [1, 1]} : vector<8x128xf32> to vector<8x32xf32>
    %212 = arith.mulf %209, %172 : vector<8x32xf32>
    %213 = arith.mulf %208, %210 : vector<8x32xf32>
    %214 = arith.addf %212, %213 : vector<8x32xf32>
    %215 = math.tanh %214 : vector<8x32xf32>
    %216 = arith.mulf %211, %215 : vector<8x32xf32>
    %c0_68 = arith.constant 0 : index
    %c0_69 = arith.constant 0 : index
    %217 = vector.load %arg2[%c0_68, %c0_69] : memref<32x128xf32, #tpu.memory_space<vmem>>, vector<32x128xf32>
    %cst_70 = arith.constant dense<0.000000e+00> : vector<8x128xf32>
    %218 = tpu.matmul %216, %217, %cst_70 {dimension_numbers = #tpu.dot_dimension_numbers<[1], [0], [0], [1], [0, 0, 1, 1], [], []>} : vector<8x32xf32>, vector<32x128xf32>, vector<8x128xf32> -> vector<8x128xf32>
    %c0_71 = arith.constant 0 : index
    %c0_72 = arith.constant 0 : index
    %219 = vector.load %arg4[%c0_71, %c0_72] : memref<1x128xf32, #tpu.memory_space<vmem>>, vector<1x128xf32>
    %220 = vector.broadcast %219 : vector<1x128xf32> to vector<8x128xf32>
    %221 = arith.addf %218, %220 : vector<8x128xf32>
    %c0_73 = arith.constant 0 : index
    %c0_74 = arith.constant 0 : index
    %222 = vector.load %arg3[%c0_73, %c0_74] : memref<32x128xf32, #tpu.memory_space<vmem>>, vector<32x128xf32>
    %cst_75 = arith.constant dense<0.000000e+00> : vector<8x128xf32>
    %223 = tpu.matmul %197, %222, %cst_75 {dimension_numbers = #tpu.dot_dimension_numbers<[1], [0], [0], [1], [0, 0, 1, 1], [], []>} : vector<8x32xf32>, vector<32x128xf32>, vector<8x128xf32> -> vector<8x128xf32>
    %224 = arith.addf %221, %223 : vector<8x128xf32>
    %225 = arith.negf %224 : vector<8x128xf32>
    %226 = math.exp %225 : vector<8x128xf32>
    %cst_76 = arith.constant 1.000000e+00 : f32
    %227 = vector.broadcast %cst_76 : f32 to vector<8x128xf32>
    %228 = arith.addf %227, %226 : vector<8x128xf32>
    %229 = arith.divf %227, %228 : vector<8x128xf32>
    %230 = math.tanh %224 : vector<8x128xf32>
    %231 = vector.extract_strided_slice %229 {offsets = [0, 0], sizes = [8, 32], strides = [1, 1]} : vector<8x128xf32> to vector<8x32xf32>
    %232 = vector.extract_strided_slice %229 {offsets = [0, 32], sizes = [8, 32], strides = [1, 1]} : vector<8x128xf32> to vector<8x32xf32>
    %233 = vector.extract_strided_slice %230 {offsets = [0, 64], sizes = [8, 32], strides = [1, 1]} : vector<8x128xf32> to vector<8x32xf32>
    %234 = vector.extract_strided_slice %229 {offsets = [0, 96], sizes = [8, 32], strides = [1, 1]} : vector<8x128xf32> to vector<8x32xf32>
    %235 = arith.mulf %232, %195 : vector<8x32xf32>
    %236 = arith.mulf %231, %233 : vector<8x32xf32>
    %237 = arith.addf %235, %236 : vector<8x32xf32>
    %238 = math.tanh %237 : vector<8x32xf32>
    %239 = arith.mulf %234, %238 : vector<8x32xf32>
    %c48 = arith.constant 48 : index
    %c0_77 = arith.constant 0 : index
    %240 = vector.load %arg0[%c48, %c0_77] : memref<64x128xf32, #tpu.memory_space<vmem>>, vector<8x128xf32>
    %c0_78 = arith.constant 0 : index
    %c0_79 = arith.constant 0 : index
    %241 = vector.load %arg1[%c0_78, %c0_79] : memref<32x128xf32, #tpu.memory_space<vmem>>, vector<32x128xf32>
    %cst_80 = arith.constant dense<0.000000e+00> : vector<8x128xf32>
    %242 = tpu.matmul %216, %241, %cst_80 {dimension_numbers = #tpu.dot_dimension_numbers<[1], [0], [0], [1], [0, 0, 1, 1], [], []>} : vector<8x32xf32>, vector<32x128xf32>, vector<8x128xf32> -> vector<8x128xf32>
    %243 = arith.addf %240, %242 : vector<8x128xf32>
    %244 = arith.negf %243 : vector<8x128xf32>
    %245 = math.exp %244 : vector<8x128xf32>
    %cst_81 = arith.constant 1.000000e+00 : f32
    %246 = vector.broadcast %cst_81 : f32 to vector<8x128xf32>
    %247 = arith.addf %246, %245 : vector<8x128xf32>
    %248 = arith.divf %246, %247 : vector<8x128xf32>
    %249 = math.tanh %243 : vector<8x128xf32>
    %250 = vector.extract_strided_slice %248 {offsets = [0, 0], sizes = [8, 32], strides = [1, 1]} : vector<8x128xf32> to vector<8x32xf32>
    %251 = vector.extract_strided_slice %248 {offsets = [0, 32], sizes = [8, 32], strides = [1, 1]} : vector<8x128xf32> to vector<8x32xf32>
    %252 = vector.extract_strided_slice %249 {offsets = [0, 64], sizes = [8, 32], strides = [1, 1]} : vector<8x128xf32> to vector<8x32xf32>
    %253 = vector.extract_strided_slice %248 {offsets = [0, 96], sizes = [8, 32], strides = [1, 1]} : vector<8x128xf32> to vector<8x32xf32>
    %254 = arith.mulf %251, %214 : vector<8x32xf32>
    %255 = arith.mulf %250, %252 : vector<8x32xf32>
    %256 = arith.addf %254, %255 : vector<8x32xf32>
    %257 = math.tanh %256 : vector<8x32xf32>
    %258 = arith.mulf %253, %257 : vector<8x32xf32>
    %c0_82 = arith.constant 0 : index
    %c0_83 = arith.constant 0 : index
    %259 = vector.load %arg2[%c0_82, %c0_83] : memref<32x128xf32, #tpu.memory_space<vmem>>, vector<32x128xf32>
    %cst_84 = arith.constant dense<0.000000e+00> : vector<8x128xf32>
    %260 = tpu.matmul %258, %259, %cst_84 {dimension_numbers = #tpu.dot_dimension_numbers<[1], [0], [0], [1], [0, 0, 1, 1], [], []>} : vector<8x32xf32>, vector<32x128xf32>, vector<8x128xf32> -> vector<8x128xf32>
    %c0_85 = arith.constant 0 : index
    %c0_86 = arith.constant 0 : index
    %261 = vector.load %arg4[%c0_85, %c0_86] : memref<1x128xf32, #tpu.memory_space<vmem>>, vector<1x128xf32>
    %262 = vector.broadcast %261 : vector<1x128xf32> to vector<8x128xf32>
    %263 = arith.addf %260, %262 : vector<8x128xf32>
    %c0_87 = arith.constant 0 : index
    %c0_88 = arith.constant 0 : index
    %264 = vector.load %arg3[%c0_87, %c0_88] : memref<32x128xf32, #tpu.memory_space<vmem>>, vector<32x128xf32>
    %cst_89 = arith.constant dense<0.000000e+00> : vector<8x128xf32>
    %265 = tpu.matmul %239, %264, %cst_89 {dimension_numbers = #tpu.dot_dimension_numbers<[1], [0], [0], [1], [0, 0, 1, 1], [], []>} : vector<8x32xf32>, vector<32x128xf32>, vector<8x128xf32> -> vector<8x128xf32>
    %266 = arith.addf %263, %265 : vector<8x128xf32>
    %267 = arith.negf %266 : vector<8x128xf32>
    %268 = math.exp %267 : vector<8x128xf32>
    %cst_90 = arith.constant 1.000000e+00 : f32
    %269 = vector.broadcast %cst_90 : f32 to vector<8x128xf32>
    %270 = arith.addf %269, %268 : vector<8x128xf32>
    %271 = arith.divf %269, %270 : vector<8x128xf32>
    %272 = math.tanh %266 : vector<8x128xf32>
    %273 = vector.extract_strided_slice %271 {offsets = [0, 0], sizes = [8, 32], strides = [1, 1]} : vector<8x128xf32> to vector<8x32xf32>
    %274 = vector.extract_strided_slice %271 {offsets = [0, 32], sizes = [8, 32], strides = [1, 1]} : vector<8x128xf32> to vector<8x32xf32>
    %275 = vector.extract_strided_slice %272 {offsets = [0, 64], sizes = [8, 32], strides = [1, 1]} : vector<8x128xf32> to vector<8x32xf32>
    %276 = vector.extract_strided_slice %271 {offsets = [0, 96], sizes = [8, 32], strides = [1, 1]} : vector<8x128xf32> to vector<8x32xf32>
    %277 = arith.mulf %274, %237 : vector<8x32xf32>
    %278 = arith.mulf %273, %275 : vector<8x32xf32>
    %279 = arith.addf %277, %278 : vector<8x32xf32>
    %280 = math.tanh %279 : vector<8x32xf32>
    %281 = arith.mulf %276, %280 : vector<8x32xf32>
    %c56 = arith.constant 56 : index
    %c0_91 = arith.constant 0 : index
    %282 = vector.load %arg0[%c56, %c0_91] : memref<64x128xf32, #tpu.memory_space<vmem>>, vector<8x128xf32>
    %c0_92 = arith.constant 0 : index
    %c0_93 = arith.constant 0 : index
    %283 = vector.load %arg1[%c0_92, %c0_93] : memref<32x128xf32, #tpu.memory_space<vmem>>, vector<32x128xf32>
    %cst_94 = arith.constant dense<0.000000e+00> : vector<8x128xf32>
    %284 = tpu.matmul %258, %283, %cst_94 {dimension_numbers = #tpu.dot_dimension_numbers<[1], [0], [0], [1], [0, 0, 1, 1], [], []>} : vector<8x32xf32>, vector<32x128xf32>, vector<8x128xf32> -> vector<8x128xf32>
    %285 = arith.addf %282, %284 : vector<8x128xf32>
    %286 = arith.negf %285 : vector<8x128xf32>
    %287 = math.exp %286 : vector<8x128xf32>
    %cst_95 = arith.constant 1.000000e+00 : f32
    %288 = vector.broadcast %cst_95 : f32 to vector<8x128xf32>
    %289 = arith.addf %288, %287 : vector<8x128xf32>
    %290 = arith.divf %288, %289 : vector<8x128xf32>
    %291 = math.tanh %285 : vector<8x128xf32>
    %292 = vector.extract_strided_slice %290 {offsets = [0, 0], sizes = [8, 32], strides = [1, 1]} : vector<8x128xf32> to vector<8x32xf32>
    %293 = vector.extract_strided_slice %290 {offsets = [0, 32], sizes = [8, 32], strides = [1, 1]} : vector<8x128xf32> to vector<8x32xf32>
    %294 = vector.extract_strided_slice %291 {offsets = [0, 64], sizes = [8, 32], strides = [1, 1]} : vector<8x128xf32> to vector<8x32xf32>
    %295 = vector.extract_strided_slice %290 {offsets = [0, 96], sizes = [8, 32], strides = [1, 1]} : vector<8x128xf32> to vector<8x32xf32>
    %296 = arith.mulf %293, %256 : vector<8x32xf32>
    %297 = arith.mulf %292, %294 : vector<8x32xf32>
    %298 = arith.addf %296, %297 : vector<8x32xf32>
    %299 = math.tanh %298 : vector<8x32xf32>
    %300 = arith.mulf %295, %299 : vector<8x32xf32>
    %c0_96 = arith.constant 0 : index
    %c0_97 = arith.constant 0 : index
    %301 = vector.load %arg2[%c0_96, %c0_97] : memref<32x128xf32, #tpu.memory_space<vmem>>, vector<32x128xf32>
    %cst_98 = arith.constant dense<0.000000e+00> : vector<8x128xf32>
    %302 = tpu.matmul %300, %301, %cst_98 {dimension_numbers = #tpu.dot_dimension_numbers<[1], [0], [0], [1], [0, 0, 1, 1], [], []>} : vector<8x32xf32>, vector<32x128xf32>, vector<8x128xf32> -> vector<8x128xf32>
    %c0_99 = arith.constant 0 : index
    %c0_100 = arith.constant 0 : index
    %303 = vector.load %arg4[%c0_99, %c0_100] : memref<1x128xf32, #tpu.memory_space<vmem>>, vector<1x128xf32>
    %304 = vector.broadcast %303 : vector<1x128xf32> to vector<8x128xf32>
    %305 = arith.addf %302, %304 : vector<8x128xf32>
    %c0_101 = arith.constant 0 : index
    %c0_102 = arith.constant 0 : index
    %306 = vector.load %arg3[%c0_101, %c0_102] : memref<32x128xf32, #tpu.memory_space<vmem>>, vector<32x128xf32>
    %cst_103 = arith.constant dense<0.000000e+00> : vector<8x128xf32>
    %307 = tpu.matmul %281, %306, %cst_103 {dimension_numbers = #tpu.dot_dimension_numbers<[1], [0], [0], [1], [0, 0, 1, 1], [], []>} : vector<8x32xf32>, vector<32x128xf32>, vector<8x128xf32> -> vector<8x128xf32>
    %308 = arith.addf %305, %307 : vector<8x128xf32>
    %309 = arith.negf %308 : vector<8x128xf32>
    %310 = math.exp %309 : vector<8x128xf32>
    %cst_104 = arith.constant 1.000000e+00 : f32
    %311 = vector.broadcast %cst_104 : f32 to vector<8x128xf32>
    %312 = arith.addf %311, %310 : vector<8x128xf32>
    %313 = arith.divf %311, %312 : vector<8x128xf32>
    %314 = math.tanh %308 : vector<8x128xf32>
    %315 = vector.extract_strided_slice %313 {offsets = [0, 0], sizes = [8, 32], strides = [1, 1]} : vector<8x128xf32> to vector<8x32xf32>
    %316 = vector.extract_strided_slice %313 {offsets = [0, 32], sizes = [8, 32], strides = [1, 1]} : vector<8x128xf32> to vector<8x32xf32>
    %317 = vector.extract_strided_slice %314 {offsets = [0, 64], sizes = [8, 32], strides = [1, 1]} : vector<8x128xf32> to vector<8x32xf32>
    %318 = vector.extract_strided_slice %313 {offsets = [0, 96], sizes = [8, 32], strides = [1, 1]} : vector<8x128xf32> to vector<8x32xf32>
    %319 = arith.mulf %316, %279 : vector<8x32xf32>
    %320 = arith.mulf %315, %317 : vector<8x32xf32>
    %321 = arith.addf %319, %320 : vector<8x32xf32>
    %322 = math.tanh %321 : vector<8x32xf32>
    %323 = arith.mulf %318, %322 : vector<8x32xf32>
    %c0_105 = arith.constant 0 : index
    %c0_106 = arith.constant 0 : index
    %324 = vector.load %arg5[%c0_105, %c0_106] : memref<8x32xf32, #tpu.memory_space<vmem>>, vector<8x32xf32>
    tpu.vector_store %arg5[%c0_105, %c0_106], %323 {strides = array<i32>} : memref<8x32xf32, #tpu.memory_space<vmem>>, vector<8x32xf32>,
    return
  }
}

</mosaic_0001>

<llo_original>
// kernel: tpu_custom_call.1
$region0: #{tpu_custom_call.1}
  #allocation0 [shape = 'u32[]', space=smem, size = 0x4, offset = 0x4, fixed_abs, tag = 'smem constant byte address 0x4 - core index']
  #allocation1 [shape = 'u32[144,128]{1,0:T(1,128)}', space=vmem, size = 0x12000, scoped, tag = 'internal scratch']
  %s0 = inlined_call_operand.hbm [shape: f32[64,128], index: 0, kind: input, shape index: {}]
  %s1 = inlined_call_operand.hbm [shape: f32[32,128], index: 1, kind: input, shape index: {}]
  %s2 = inlined_call_operand.hbm [shape: f32[32,128], index: 2, kind: input, shape index: {}]
  %s3 = inlined_call_operand.hbm [shape: f32[32,128], index: 3, kind: input, shape index: {}]
  %s4 = inlined_call_operand.vmem [shape: f32[1,128], index: 4, kind: input, shape index: {}]
  %s5 = inlined_call_operand.hbm [shape: f32[8,32], index: 5, kind: output, shape index: {}]
  %s6 = sld [smem:[#allocation0]]
  $region46: #{tpu_custom_call.1} parent=0
    _
  %s8 = ssub.s32 1, %s6
  %s9 = scalar_select 0, %s8, %s6
  $region1: #{tpu_custom_call.1} parent=0
    #allocation2 [shape = 'u8[32768]{0}', space=vmem, size = 0x8000, scoped, tag = 'input window, operand 0, single buffered']
    #allocation3 [shape = 's32[1]{0}', space=sflag, size = 0x4, scoped, tag = 'scoped memory for tpu_custom_call.1']
    #allocation4 [shape = 's32[1]{0}', space=sflag, size = 0x4, scoped, tag = 'scoped memory for tpu_custom_call.1']
    #allocation5 [shape = 'u8[16384]{0}', space=vmem, size = 0x4000, scoped, tag = 'input window, operand 1, single buffered']
    #allocation6 [shape = 's32[1]{0}', space=sflag, size = 0x4, scoped, tag = 'scoped memory for tpu_custom_call.1']
    #allocation7 [shape = 'u8[16384]{0}', space=vmem, size = 0x4000, scoped, tag = 'input window, operand 2, single buffered']
    #allocation8 [shape = 'u8[16384]{0}', space=vmem, size = 0x4000, scoped, tag = 'input window, operand 3, single buffered']
    #allocation9 [shape = 's32[1]{0}', space=sflag, size = 0x4, scoped, tag = 'scoped memory for tpu_custom_call.1']
    #allocation10 [shape = 'u8[4096]{0}', space=vmem, size = 0x1000, scoped, tag = 'output window, operand 0, single buffered']
    %10 = vsyncpa [#allocation3], 0
    %11 = vsyncpa [#allocation6], 0
    %12 = vsyncpa [#allocation9], 0
    %13 = vsyncpa [#allocation4], 0
    // Predicated region
    $region2: #{tpu_custom_call.1} parent=1 // pred_check
      _
    $region3: #{tpu_custom_call.1} parent=1 // pred_check_branch
      %15 = sbr.rel (0) target = $region5
    $region4: #{tpu_custom_call.1} parent=1 // pred_region
      %s17 = ssub.s32 1024, 1024
      %18 = vsyncadd [#allocation3], %s17
      %s19 = sshll.u32 [#allocation2], 4
      %s20 = int_to_ptr.vmem [resolvable:$true] %s19
      %25 = dma.hbm_to_vmem [thread:$0]  %s0, 1024, %s20, [#allocation3], 128, 128, 8
    $region5: #{tpu_custom_call.1} parent=1 // pred_fallthru
      _
    // Predicated region
    $region6: #{tpu_custom_call.1} parent=1 // pred_check
      _
    $region7: #{tpu_custom_call.1} parent=1 // pred_check_branch
      %27 = sbr.rel (0) target = $region9
    $region8: #{tpu_custom_call.1} parent=1 // pred_region
      %s29 = ssub.s32 512, 512
      %30 = vsyncadd [#allocation6], %s29
      %s31 = sshll.u32 [#allocation5], 4
      %s32 = int_to_ptr.vmem [resolvable:$true] %s31
      %37 = dma.hbm_to_vmem [thread:$0]  %s1, 512, %s32, [#allocation6], 128, 128, 8
    $region9: #{tpu_custom_call.1} parent=1 // pred_fallthru
      _
    // Predicated region
    $region10: #{tpu_custom_call.1} parent=1 // pred_check
      _
    $region11: #{tpu_custom_call.1} parent=1 // pred_check_branch
      %39 = sbr.rel (0) target = $region13
    $region12: #{tpu_custom_call.1} parent=1 // pred_region
      %s41 = ssub.s32 512, 512
      %42 = vsyncadd [#allocation6], %s41
      %s43 = sshll.u32 [#allocation7], 4
      %s44 = int_to_ptr.vmem [resolvable:$true] %s43
      %49 = dma.hbm_to_vmem [thread:$0]  %s2, 512, %s44, [#allocation6], 128, 128, 8
    $region13: #{tpu_custom_call.1} parent=1 // pred_fallthru
      _
    // Predicated region
    $region14: #{tpu_custom_call.1} parent=1 // pred_check
      _
    $region15: #{tpu_custom_call.1} parent=1 // pred_check_branch
      %51 = sbr.rel (0) target = $region17
    $region16: #{tpu_custom_call.1} parent=1 // pred_region
      %s53 = ssub.s32 512, 512
      %54 = vsyncadd [#allocation9], %s53
      %s55 = sshll.u32 [#allocation8], 4
      %s56 = int_to_ptr.vmem [resolvable:$true] %s55
      %61 = dma.hbm_to_vmem [thread:$0]  %s3, 512, %s56, [#allocation9], 128, 128, 8
    $region17: #{tpu_custom_call.1} parent=1 // pred_fallthru
      _
    // Predicated region
    $region18: #{tpu_custom_call.1} parent=1 // pred_check
      _
    $region19: #{tpu_custom_call.1} parent=1 // pred_check_branch
      %63 = sbr.rel (0) target = $region21
    $region20: #{tpu_custom_call.1} parent=1 // pred_region
      _
    $region21: #{tpu_custom_call.1} parent=1 // pred_fallthru
      _
    // Predicated region
    $region22: #{tpu_custom_call.1} parent=1 // pred_check
      _
    $region23: #{tpu_custom_call.1} parent=1 // pred_check_branch
      %65 = sbr.rel (0) target = $region25
    $region24: #{tpu_custom_call.1} parent=1 // pred_region
      %66 = dma.done [#allocation3], 1024
    $region25: #{tpu_custom_call.1} parent=1 // pred_fallthru
      _
    // Predicated region
    $region26: #{tpu_custom_call.1} parent=1 // pred_check
      _
    $region27: #{tpu_custom_call.1} parent=1 // pred_check_branch
      %68 = sbr.rel (0) target = $region29
    $region28: #{tpu_custom_call.1} parent=1 // pred_region
      %69 = dma.done [#allocation6], 512
    $region29: #{tpu_custom_call.1} parent=1 // pred_fallthru
      _
    // Predicated region
    $region30: #{tpu_custom_call.1} parent=1 // pred_check
      _
    $region31: #{tpu_custom_call.1} parent=1 // pred_check_branch
      %71 = sbr.rel (0) target = $region33
    $region32: #{tpu_custom_call.1} parent=1 // pred_region
      %72 = dma.done [#allocation6], 512
    $region33: #{tpu_custom_call.1} parent=1 // pred_fallthru
      _
    // Predicated region
    $region34: #{tpu_custom_call.1} parent=1 // pred_check
      _
    $region35: #{tpu_custom_call.1} parent=1 // pred_check_branch
      %74 = sbr.rel (0) target = $region37
    $region36: #{tpu_custom_call.1} parent=1 // pred_region
      %75 = dma.done [#allocation9], 512
    $region37: #{tpu_custom_call.1} parent=1 // pred_fallthru
      _
    %v76 = vld [vmem:[#allocation2] sm:$0xff]
    %v77 = vxor.u32 %v76, 2147483648
    %v78 = vmul.f32 %v77, 1.442695
    %v79 = vpow.pop %v78
    %v80 = vadd.f32 %v79, 1.0
    %v81 = vrcp.pop %v80
    %v82 = vmul.f32 1.0, %v81
    %v83 = vtanh.pop %v76
    %85 = vrot.lane.b32.xlu0 %v83, 64
    %v86 = vpop.permute.xlu0 %85
    %v88 = vmul.f32 %v82, %v86
    %v89 = vtanh.pop %v88
    %91 = vrot.lane.b32.xlu0 %v89, 96
    %v92 = vpop.permute.xlu0 %91
    %v94 = vmul.f32 %v82, %v92
    %v95 = vld [vmem:[#allocation7] sm:$0xff]
    %v96 = vld [vmem:[#allocation7 + $0x8] sm:$0xff]
    %v97 = vld [vmem:[#allocation7 + $0x10] sm:$0xff]
    %v98 = vld [vmem:[#allocation7 + $0x18] sm:$0xff]
    %v99 = vld [vmem:[%s4] sm:$0x1]
    %v101 = vlaneseq
    %v102 = vshrl.u32 %v101, 7
    %v103 = vsub.s32 0, %v102
    %v104 = vrot.slane %v99, %v103
    %107 = vrot.lane.b32.xlu0 %v94, 32
    %v108 = vpop.permute.xlu0 %107
    %vm109 = vcmask 261120
    %v110 = vsel %vm109, %v108, 0
    %112 = vmatprep.subr.mxu0 0.0
    %113 = vmatpush1.msra.mxu0 0.0
    %114 = vmatprep.subr.mxu0 0.0
    %115 = vmatpush1.msra.mxu0 0.0
    %116 = vmatprep.subr.mxu0 0.0
    %117 = vmatpush1.msra.mxu0 0.0
    %118 = vmatprep.subr.mxu0 0.0
    %119 = vmatpush1.msra.mxu0 0.0
    %120 = vmatprep.subr.mxu0 0.0
    %121 = vmatpush1.msra.mxu0 0.0
    %122 = vmatprep.subr.mxu0 0.0
    %123 = vmatpush1.msra.mxu0 0.0
    %124 = vmatprep.subr.mxu0 0.0
    %125 = vmatpush1.msra.mxu0 0.0
    %126 = vmatprep.subr.mxu0 0.0
    %127 = vmatpush1.msra.mxu0 0.0
    %128 = vmatprep.subr.mxu0 0.0
    %129 = vmatpush1.msra.mxu0 0.0
    %130 = vmatprep.subr.mxu0 0.0
    %131 = vmatpush1.msra.mxu0 0.0
    %132 = vmatprep.subr.mxu0 0.0
    %133 = vmatpush1.msra.mxu0 0.0
    %134 = vmatprep.subr.mxu0 0.0
    %135 = vmatpush1.msra.mxu0 0.0
    %136 = vmatprep.subr.mxu0 0.0
    %137 = vmatpush1.msra.mxu0 %v98
    %138 = vmatprep.subr.mxu0 0.0
    %139 = vmatpush1.msra.mxu0 %v97
    %140 = vmatprep.subr.mxu0 0.0
    %141 = vmatpush1.msra.mxu0 %v96
    %142 = vmatprep.subr.mxu0 0.0
    %143 = vmatpush1.msra.mxu0 %v95
    %144 = vmatprep.subr.mxu0 0.0
    %145 = vmatpush2.msra.mxu0 0.0
    %146 = vmatprep.subr.mxu0 0.0
    %147 = vmatpush2.msra.mxu0 0.0
    %148 = vmatprep.subr.mxu0 0.0
    %149 = vmatpush2.msra.mxu0 0.0
    %150 = vmatprep.subr.mxu0 0.0
    %151 = vmatpush2.msra.mxu0 0.0
    %152 = vmatprep.subr.mxu0 0.0
    %153 = vmatpush2.msra.mxu0 0.0
    %154 = vmatprep.subr.mxu0 0.0
    %155 = vmatpush2.msra.mxu0 0.0
    %156 = vmatprep.subr.mxu0 0.0
    %157 = vmatpush2.msra.mxu0 0.0
    %158 = vmatprep.subr.mxu0 0.0
    %159 = vmatpush2.msra.mxu0 0.0
    %160 = vmatprep.subr.mxu0 0.0
    %161 = vmatpush2.msra.mxu0 0.0
    %162 = vmatprep.subr.mxu0 0.0
    %163 = vmatpush2.msra.mxu0 0.0
    %164 = vmatprep.subr.mxu0 0.0
    %165 = vmatpush2.msra.mxu0 0.0
    %166 = vmatprep.subr.mxu0 0.0
    %167 = vmatpush2.msra.mxu0 0.0
    %168 = vmatprep.subr.mxu0 0.0
    %169 = vmatpush2.msra.mxu0 0.0
    %170 = vmatprep.subr.mxu0 0.0
    %171 = vmatpush2.msra.mxu0 0.0
    %172 = vmatprep.subr.mxu0 0.0
    %173 = vmatpush2.msra.mxu0 0.0
    %174 = vmatprep.subr.mxu0 0.0
    %175 = vmatpush2.msra.mxu0 0.0
    %176 = vmatprep.mubr.f32.mxu0 0.0
    %177 = vmatmul.mubr.f32.gmra.mxu0 %v110
    %v178 = vpop.f32.mrf.mxu0
    %v179 = vadd.f32 %v104, %v178
    %v180 = vpop.f32.mrf.mxu0
    %181 = vdwg.mxu0
    %v182 = vxor.u32 %v179, 2147483648
    %v183 = vmul.f32 %v182, 1.442695
    %v184 = vpow.pop %v183
    %v185 = vadd.f32 %v184, 1.0
    %v186 = vrcp.pop %v185
    %v187 = vmul.f32 1.0, %v186
    %v188 = vtanh.pop %v179
    %190 = vrot.lane.b32.xlu0 %v188, 64
    %v191 = vpop.permute.xlu0 %190
    %v193 = vmul.f32 %v187, %v191
    %v194 = vtanh.pop %v193
    %196 = vrot.lane.b32.xlu0 %v194, 96
    %v197 = vpop.permute.xlu0 %196
    %v199 = vmul.f32 %v187, %v197
    %v200 = vld [vmem:[#allocation2 + $0x8] sm:$0xff]
    %v201 = vld [vmem:[#allocation5] sm:$0xff]
    %v202 = vld [vmem:[#allocation5 + $0x8] sm:$0xff]
    %v203 = vld [vmem:[#allocation5 + $0x10] sm:$0xff]
    %v204 = vld [vmem:[#allocation5 + $0x18] sm:$0xff]
    %205 = vmatprep.subr.mxu0 0.0
    %206 = vmatpush1.msra.mxu0 0.0
    %207 = vmatprep.subr.mxu0 0.0
    %208 = vmatpush1.msra.mxu0 0.0
    %209 = vmatprep.subr.mxu0 0.0
    %210 = vmatpush1.msra.mxu0 0.0
    %211 = vmatprep.subr.mxu0 0.0
    %212 = vmatpush1.msra.mxu0 0.0
    %213 = vmatprep.subr.mxu0 0.0
    %214 = vmatpush1.msra.mxu0 0.0
    %215 = vmatprep.subr.mxu0 0.0
    %216 = vmatpush1.msra.mxu0 0.0
    %217 = vmatprep.subr.mxu0 0.0
    %218 = vmatpush1.msra.mxu0 0.0
    %219 = vmatprep.subr.mxu0 0.0
    %220 = vmatpush1.msra.mxu0 0.0
    %221 = vmatprep.subr.mxu0 0.0
    %222 = vmatpush1.msra.mxu0 0.0
    %223 = vmatprep.subr.mxu0 0.0
    %224 = vmatpush1.msra.mxu0 0.0
    %225 = vmatprep.subr.mxu0 0.0
    %226 = vmatpush1.msra.mxu0 0.0
    %227 = vmatprep.subr.mxu0 0.0
    %228 = vmatpush1.msra.mxu0 0.0
    %229 = vmatprep.subr.mxu0 0.0
    %230 = vmatpush1.msra.mxu0 %v204
    %231 = vmatprep.subr.mxu0 0.0
    %232 = vmatpush1.msra.mxu0 %v203
    %233 = vmatprep.subr.mxu0 0.0
    %234 = vmatpush1.msra.mxu0 %v202
    %235 = vmatprep.subr.mxu0 0.0
    %236 = vmatpush1.msra.mxu0 %v201
    %237 = vmatprep.subr.mxu0 0.0
    %238 = vmatpush2.msra.mxu0 0.0
    %239 = vmatprep.subr.mxu0 0.0
    %240 = vmatpush2.msra.mxu0 0.0
    %241 = vmatprep.subr.mxu0 0.0
    %242 = vmatpush2.msra.mxu0 0.0
    %243 = vmatprep.subr.mxu0 0.0
    %244 = vmatpush2.msra.mxu0 0.0
    %245 = vmatprep.subr.mxu0 0.0
    %246 = vmatpush2.msra.mxu0 0.0
    %247 = vmatprep.subr.mxu0 0.0
    %248 = vmatpush2.msra.mxu0 0.0
    %249 = vmatprep.subr.mxu0 0.0
    %250 = vmatpush2.msra.mxu0 0.0
    %251 = vmatprep.subr.mxu0 0.0
    %252 = vmatpush2.msra.mxu0 0.0
    %253 = vmatprep.subr.mxu0 0.0
    %254 = vmatpush2.msra.mxu0 0.0
    %255 = vmatprep.subr.mxu0 0.0
    %256 = vmatpush2.msra.mxu0 0.0
    %257 = vmatprep.subr.mxu0 0.0
    %258 = vmatpush2.msra.mxu0 0.0
    %259 = vmatprep.subr.mxu0 0.0
    %260 = vmatpush2.msra.mxu0 0.0
    %261 = vmatprep.subr.mxu0 0.0
    %262 = vmatpush2.msra.mxu0 0.0
    %263 = vmatprep.subr.mxu0 0.0
    %264 = vmatpush2.msra.mxu0 0.0
    %265 = vmatprep.subr.mxu0 0.0
    %266 = vmatpush2.msra.mxu0 0.0
    %267 = vmatprep.subr.mxu0 0.0
    %268 = vmatpush2.msra.mxu0 0.0
    %269 = vmatprep.mubr.f32.mxu0 0.0
    %270 = vmatmul.mubr.f32.gmra.mxu0 %v110
    %v271 = vpop.f32.mrf.mxu0
    %v272 = vadd.f32 0.0, %v271
    %v273 = vpop.f32.mrf.mxu0
    %274 = vdwg.mxu0
    %v275 = vadd.f32 %v200, %v272
    %v276 = vxor.u32 %v275, 2147483648
    %v277 = vmul.f32 %v276, 1.442695
    %v278 = vpow.pop %v277
    %v279 = vadd.f32 %v278, 1.0
    %v280 = vrcp.pop %v279
    %v281 = vmul.f32 1.0, %v280
    %v282 = vtanh.pop %v275
    %284 = vrot.lane.b32.xlu0 %v88, 32
    %v285 = vpop.permute.xlu0 %284
    %v287 = vmul.f32 %v281, %v285
    %289 = vrot.lane.b32.xlu0 %v282, 64
    %v290 = vpop.permute.xlu0 %289
    %v292 = vmul.f32 %v281, %v290
    %294 = vrot.lane.b32.xlu0 %v292, 32
    %v295 = vpop.permute.xlu0 %294
    %v297 = vadd.f32 %v287, %v295
    %v298 = vtanh.pop %v297
    %300 = vrot.lane.b32.xlu0 %v298, 64
    %v301 = vpop.permute.xlu0 %300
    %v303 = vmul.f32 %v281, %v301
    %305 = vrot.lane.b32.xlu0 %v303, 32
    %v306 = vpop.permute.xlu0 %305
    %v307 = vsel %vm109, %v306, 0
    %309 = vmatprep.subr.mxu0 0.0
    %310 = vmatpush1.msra.mxu0 0.0
    %311 = vmatprep.subr.mxu0 0.0
    %312 = vmatpush1.msra.mxu0 0.0
    %313 = vmatprep.subr.mxu0 0.0
    %314 = vmatpush1.msra.mxu0 0.0
    %315 = vmatprep.subr.mxu0 0.0
    %316 = vmatpush1.msra.mxu0 0.0
    %317 = vmatprep.subr.mxu0 0.0
    %318 = vmatpush1.msra.mxu0 0.0
    %319 = vmatprep.subr.mxu0 0.0
    %320 = vmatpush1.msra.mxu0 0.0
    %321 = vmatprep.subr.mxu0 0.0
    %322 = vmatpush1.msra.mxu0 0.0
    %323 = vmatprep.subr.mxu0 0.0
    %324 = vmatpush1.msra.mxu0 0.0
    %325 = vmatprep.subr.mxu0 0.0
    %326 = vmatpush1.msra.mxu0 0.0
    %327 = vmatprep.subr.mxu0 0.0
    %328 = vmatpush1.msra.mxu0 0.0
    %329 = vmatprep.subr.mxu0 0.0
    %330 = vmatpush1.msra.mxu0 0.0
    %331 = vmatprep.subr.mxu0 0.0
    %332 = vmatpush1.msra.mxu0 0.0
    %333 = vmatprep.subr.mxu0 0.0
    %334 = vmatpush1.msra.mxu0 %v98
    %335 = vmatprep.subr.mxu0 0.0
    %336 = vmatpush1.msra.mxu0 %v97
    %337 = vmatprep.subr.mxu0 0.0
    %338 = vmatpush1.msra.mxu0 %v96
    %339 = vmatprep.subr.mxu0 0.0
    %340 = vmatpush1.msra.mxu0 %v95
    %341 = vmatprep.subr.mxu0 0.0
    %342 = vmatpush2.msra.mxu0 0.0
    %343 = vmatprep.subr.mxu0 0.0
    %344 = vmatpush2.msra.mxu0 0.0
    %345 = vmatprep.subr.mxu0 0.0
    %346 = vmatpush2.msra.mxu0 0.0
    %347 = vmatprep.subr.mxu0 0.0
    %348 = vmatpush2.msra.mxu0 0.0
    %349 = vmatprep.subr.mxu0 0.0
    %350 = vmatpush2.msra.mxu0 0.0
    %351 = vmatprep.subr.mxu0 0.0
    %352 = vmatpush2.msra.mxu0 0.0
    %353 = vmatprep.subr.mxu0 0.0
    %354 = vmatpush2.msra.mxu0 0.0
    %355 = vmatprep.subr.mxu0 0.0
    %356 = vmatpush2.msra.mxu0 0.0
    %357 = vmatprep.subr.mxu0 0.0
    %358 = vmatpush2.msra.mxu0 0.0
    %359 = vmatprep.subr.mxu0 0.0
    %360 = vmatpush2.msra.mxu0 0.0
    %361 = vmatprep.subr.mxu0 0.0
    %362 = vmatpush2.msra.mxu0 0.0
    %363 = vmatprep.subr.mxu0 0.0
    %364 = vmatpush2.msra.mxu0 0.0
    %365 = vmatprep.subr.mxu0 0.0
    %366 = vmatpush2.msra.mxu0 0.0
    %367 = vmatprep.subr.mxu0 0.0
    %368 = vmatpush2.msra.mxu0 0.0
    %369 = vmatprep.subr.mxu0 0.0
    %370 = vmatpush2.msra.mxu0 0.0
    %371 = vmatprep.subr.mxu0 0.0
    %372 = vmatpush2.msra.mxu0 0.0
    %373 = vmatprep.mubr.f32.mxu0 0.0
    %374 = vmatmul.mubr.f32.gmra.mxu0 %v307
    %v375 = vpop.f32.mrf.mxu0
    %v376 = vadd.f32 %v104, %v375
    %v377 = vpop.f32.mrf.mxu0
    %378 = vdwg.mxu0
    %v379 = vld [vmem:[#allocation8] sm:$0xff]
    %v380 = vld [vmem:[#allocation8 + $0x8] sm:$0xff]
    %v381 = vld [vmem:[#allocation8 + $0x10] sm:$0xff]
    %v382 = vld [vmem:[#allocation8 + $0x18] sm:$0xff]
    %384 = vrot.lane.b32.xlu0 %v199, 32
    %v385 = vpop.permute.xlu0 %384
    %v386 = vsel %vm109, %v385, 0
    %388 = vmatprep.subr.mxu0 0.0
    %389 = vmatpush1.msra.mxu0 0.0
    %390 = vmatprep.subr.mxu0 0.0
    %391 = vmatpush1.msra.mxu0 0.0
    %392 = vmatprep.subr.mxu0 0.0
    %393 = vmatpush1.msra.mxu0 0.0
    %394 = vmatprep.subr.mxu0 0.0
    %395 = vmatpush1.msra.mxu0 0.0
    %396 = vmatprep.subr.mxu0 0.0
    %397 = vmatpush1.msra.mxu0 0.0
    %398 = vmatprep.subr.mxu0 0.0
    %399 = vmatpush1.msra.mxu0 0.0
    %400 = vmatprep.subr.mxu0 0.0
    %401 = vmatpush1.msra.mxu0 0.0
    %402 = vmatprep.subr.mxu0 0.0
    %403 = vmatpush1.msra.mxu0 0.0
    %404 = vmatprep.subr.mxu0 0.0
    %405 = vmatpush1.msra.mxu0 0.0
    %406 = vmatprep.subr.mxu0 0.0
    %407 = vmatpush1.msra.mxu0 0.0
    %408 = vmatprep.subr.mxu0 0.0
    %409 = vmatpush1.msra.mxu0 0.0
    %410 = vmatprep.subr.mxu0 0.0
    %411 = vmatpush1.msra.mxu0 0.0
    %412 = vmatprep.subr.mxu0 0.0
    %413 = vmatpush1.msra.mxu0 %v382
    %414 = vmatprep.subr.mxu0 0.0
    %415 = vmatpush1.msra.mxu0 %v381
    %416 = vmatprep.subr.mxu0 0.0
    %417 = vmatpush1.msra.mxu0 %v380
    %418 = vmatprep.subr.mxu0 0.0
    %419 = vmatpush1.msra.mxu0 %v379
    %420 = vmatprep.subr.mxu0 0.0
    %421 = vmatpush2.msra.mxu0 0.0
    %422 = vmatprep.subr.mxu0 0.0
    %423 = vmatpush2.msra.mxu0 0.0
    %424 = vmatprep.subr.mxu0 0.0
    %425 = vmatpush2.msra.mxu0 0.0
    %426 = vmatprep.subr.mxu0 0.0
    %427 = vmatpush2.msra.mxu0 0.0
    %428 = vmatprep.subr.mxu0 0.0
    %429 = vmatpush2.msra.mxu0 0.0
    %430 = vmatprep.subr.mxu0 0.0
    %431 = vmatpush2.msra.mxu0 0.0
    %432 = vmatprep.subr.mxu0 0.0
    %433 = vmatpush2.msra.mxu0 0.0
    %434 = vmatprep.subr.mxu0 0.0
    %435 = vmatpush2.msra.mxu0 0.0
    %436 = vmatprep.subr.mxu0 0.0
    %437 = vmatpush2.msra.mxu0 0.0
    %438 = vmatprep.subr.mxu0 0.0
    %439 = vmatpush2.msra.mxu0 0.0
    %440 = vmatprep.subr.mxu0 0.0
    %441 = vmatpush2.msra.mxu0 0.0
    %442 = vmatprep.subr.mxu0 0.0
    %443 = vmatpush2.msra.mxu0 0.0
    %444 = vmatprep.subr.mxu0 0.0
    %445 = vmatpush2.msra.mxu0 0.0
    %446 = vmatprep.subr.mxu0 0.0
    %447 = vmatpush2.msra.mxu0 0.0
    %448 = vmatprep.subr.mxu0 0.0
    %449 = vmatpush2.msra.mxu0 0.0
    %450 = vmatprep.subr.mxu0 0.0
    %451 = vmatpush2.msra.mxu0 0.0
    %452 = vmatprep.mubr.f32.mxu0 0.0
    %453 = vmatmul.mubr.f32.gmra.mxu0 %v386
    %v454 = vpop.f32.mrf.mxu0
    %v455 = vadd.f32 0.0, %v454
    %v456 = vpop.f32.mrf.mxu0
    %457 = vdwg.mxu0
    %v458 = vadd.f32 %v376, %v455
    %v459 = vxor.u32 %v458, 2147483648
    %v460 = vmul.f32 %v459, 1.442695
    %v461 = vpow.pop %v460
    %v462 = vadd.f32 %v461, 1.0
    %v463 = vrcp.pop %v462
    %v464 = vmul.f32 1.0, %v463
    %v465 = vtanh.pop %v458
    %467 = vrot.lane.b32.xlu0 %v193, 32
    %v468 = vpop.permute.xlu0 %467
    %v470 = vmul.f32 %v464, %v468
    %472 = vrot.lane.b32.xlu0 %v465, 64
    %v473 = vpop.permute.xlu0 %472
    %v475 = vmul.f32 %v464, %v473
    %477 = vrot.lane.b32.xlu0 %v475, 32
    %v478 = vpop.permute.xlu0 %477
    %v480 = vadd.f32 %v470, %v478
    %v481 = vtanh.pop %v480
    %483 = vrot.lane.b32.xlu0 %v481, 64
    %v484 = vpop.permute.xlu0 %483
    %v486 = vmul.f32 %v464, %v484
    %v487 = vld [vmem:[#allocation2 + $0x10] sm:$0xff]
    %488 = vmatprep.subr.mxu0 0.0
    %489 = vmatpush1.msra.mxu0 0.0
    %490 = vmatprep.subr.mxu0 0.0
    %491 = vmatpush1.msra.mxu0 0.0
    %492 = vmatprep.subr.mxu0 0.0
    %493 = vmatpush1.msra.mxu0 0.0
    %494 = vmatprep.subr.mxu0 0.0
    %495 = vmatpush1.msra.mxu0 0.0
    %496 = vmatprep.subr.mxu0 0.0
    %497 = vmatpush1.msra.mxu0 0.0
    %498 = vmatprep.subr.mxu0 0.0
    %499 = vmatpush1.msra.mxu0 0.0
    %500 = vmatprep.subr.mxu0 0.0
    %501 = vmatpush1.msra.mxu0 0.0
    %502 = vmatprep.subr.mxu0 0.0
    %503 = vmatpush1.msra.mxu0 0.0
    %504 = vmatprep.subr.mxu0 0.0
    %505 = vmatpush1.msra.mxu0 0.0
    %506 = vmatprep.subr.mxu0 0.0
    %507 = vmatpush1.msra.mxu0 0.0
    %508 = vmatprep.subr.mxu0 0.0
    %509 = vmatpush1.msra.mxu0 0.0
    %510 = vmatprep.subr.mxu0 0.0
    %511 = vmatpush1.msra.mxu0 0.0
    %512 = vmatprep.subr.mxu0 0.0
    %513 = vmatpush1.msra.mxu0 %v204
    %514 = vmatprep.subr.mxu0 0.0
    %515 = vmatpush1.msra.mxu0 %v203
    %516 = vmatprep.subr.mxu0 0.0
    %517 = vmatpush1.msra.mxu0 %v202
    %518 = vmatprep.subr.mxu0 0.0
    %519 = vmatpush1.msra.mxu0 %v201
    %520 = vmatprep.subr.mxu0 0.0
    %521 = vmatpush2.msra.mxu0 0.0
    %522 = vmatprep.subr.mxu0 0.0
    %523 = vmatpush2.msra.mxu0 0.0
    %524 = vmatprep.subr.mxu0 0.0
    %525 = vmatpush2.msra.mxu0 0.0
    %526 = vmatprep.subr.mxu0 0.0
    %527 = vmatpush2.msra.mxu0 0.0
    %528 = vmatprep.subr.mxu0 0.0
    %529 = vmatpush2.msra.mxu0 0.0
    %530 = vmatprep.subr.mxu0 0.0
    %531 = vmatpush2.msra.mxu0 0.0
    %532 = vmatprep.subr.mxu0 0.0
    %533 = vmatpush2.msra.mxu0 0.0
    %534 = vmatprep.subr.mxu0 0.0
    %535 = vmatpush2.msra.mxu0 0.0
    %536 = vmatprep.subr.mxu0 0.0
    %537 = vmatpush2.msra.mxu0 0.0
    %538 = vmatprep.subr.mxu0 0.0
    %539 = vmatpush2.msra.mxu0 0.0
    %540 = vmatprep.subr.mxu0 0.0
    %541 = vmatpush2.msra.mxu0 0.0
    %542 = vmatprep.subr.mxu0 0.0
    %543 = vmatpush2.msra.mxu0 0.0
    %544 = vmatprep.subr.mxu0 0.0
    %545 = vmatpush2.msra.mxu0 0.0
    %546 = vmatprep.subr.mxu0 0.0
    %547 = vmatpush2.msra.mxu0 0.0
    %548 = vmatprep.subr.mxu0 0.0
    %549 = vmatpush2.msra.mxu0 0.0
    %550 = vmatprep.subr.mxu0 0.0
    %551 = vmatpush2.msra.mxu0 0.0
    %552 = vmatprep.mubr.f32.mxu0 0.0
    %553 = vmatmul.mubr.f32.gmra.mxu0 %v307
    %v554 = vpop.f32.mrf.mxu0
    %v555 = vadd.f32 0.0, %v554
    %v556 = vpop.f32.mrf.mxu0
    %557 = vdwg.mxu0
    %v558 = vadd.f32 %v487, %v555
    %v559 = vxor.u32 %v558, 2147483648
    %v560 = vmul.f32 %v559, 1.442695
    %v561 = vpow.pop %v560
    %v562 = vadd.f32 %v561, 1.0
    %v563 = vrcp.pop %v562
    %v564 = vmul.f32 1.0, %v563
    %v565 = vtanh.pop %v558
    %v566 = vmul.f32 %v564, %v297
    %568 = vrot.lane.b32.xlu0 %v565, 64
    %v569 = vpop.permute.xlu0 %568
    %v571 = vmul.f32 %v564, %v569
    %573 = vrot.lane.b32.xlu0 %v571, 32
    %v574 = vpop.permute.xlu0 %573
    %v576 = vadd.f32 %v566, %v574
    %v577 = vtanh.pop %v576
    %579 = vrot.lane.b32.xlu0 %v577, 64
    %v580 = vpop.permute.xlu0 %579
    %v582 = vmul.f32 %v564, %v580
    %584 = vrot.lane.b32.xlu0 %v582, 32
    %v585 = vpop.permute.xlu0 %584
    %v586 = vsel %vm109, %v585, 0
    %588 = vmatprep.subr.mxu0 0.0
    %589 = vmatpush1.msra.mxu0 0.0
    %590 = vmatprep.subr.mxu0 0.0
    %591 = vmatpush1.msra.mxu0 0.0
    %592 = vmatprep.subr.mxu0 0.0
    %593 = vmatpush1.msra.mxu0 0.0
    %594 = vmatprep.subr.mxu0 0.0
    %595 = vmatpush1.msra.mxu0 0.0
    %596 = vmatprep.subr.mxu0 0.0
    %597 = vmatpush1.msra.mxu0 0.0
    %598 = vmatprep.subr.mxu0 0.0
    %599 = vmatpush1.msra.mxu0 0.0
    %600 = vmatprep.subr.mxu0 0.0
    %601 = vmatpush1.msra.mxu0 0.0
    %602 = vmatprep.subr.mxu0 0.0
    %603 = vmatpush1.msra.mxu0 0.0
    %604 = vmatprep.subr.mxu0 0.0
    %605 = vmatpush1.msra.mxu0 0.0
    %606 = vmatprep.subr.mxu0 0.0
    %607 = vmatpush1.msra.mxu0 0.0
    %608 = vmatprep.subr.mxu0 0.0
    %609 = vmatpush1.msra.mxu0 0.0
    %610 = vmatprep.subr.mxu0 0.0
    %611 = vmatpush1.msra.mxu0 0.0
    %612 = vmatprep.subr.mxu0 0.0
    %613 = vmatpush1.msra.mxu0 %v98
    %614 = vmatprep.subr.mxu0 0.0
    %615 = vmatpush1.msra.mxu0 %v97
    %616 = vmatprep.subr.mxu0 0.0
    %617 = vmatpush1.msra.mxu0 %v96
    %618 = vmatprep.subr.mxu0 0.0
    %619 = vmatpush1.msra.mxu0 %v95
    %620 = vmatprep.subr.mxu0 0.0
    %621 = vmatpush2.msra.mxu0 0.0
    %622 = vmatprep.subr.mxu0 0.0
    %623 = vmatpush2.msra.mxu0 0.0
    %624 = vmatprep.subr.mxu0 0.0
    %625 = vmatpush2.msra.mxu0 0.0
    %626 = vmatprep.subr.mxu0 0.0
    %627 = vmatpush2.msra.mxu0 0.0
    %628 = vmatprep.subr.mxu0 0.0
    %629 = vmatpush2.msra.mxu0 0.0
    %630 = vmatprep.subr.mxu0 0.0
    %631 = vmatpush2.msra.mxu0 0.0
    %632 = vmatprep.subr.mxu0 0.0
    %633 = vmatpush2.msra.mxu0 0.0
    %634 = vmatprep.subr.mxu0 0.0
    %635 = vmatpush2.msra.mxu0 0.0
    %636 = vmatprep.subr.mxu0 0.0
    %637 = vmatpush2.msra.mxu0 0.0
    %638 = vmatprep.subr.mxu0 0.0
    %639 = vmatpush2.msra.mxu0 0.0
    %640 = vmatprep.subr.mxu0 0.0
    %641 = vmatpush2.msra.mxu0 0.0
    %642 = vmatprep.subr.mxu0 0.0
    %643 = vmatpush2.msra.mxu0 0.0
    %644 = vmatprep.subr.mxu0 0.0
    %645 = vmatpush2.msra.mxu0 0.0
    %646 = vmatprep.subr.mxu0 0.0
    %647 = vmatpush2.msra.mxu0 0.0
    %648 = vmatprep.subr.mxu0 0.0
    %649 = vmatpush2.msra.mxu0 0.0
    %650 = vmatprep.subr.mxu0 0.0
    %651 = vmatpush2.msra.mxu0 0.0
    %652 = vmatprep.mubr.f32.mxu0 0.0
    %653 = vmatmul.mubr.f32.gmra.mxu0 %v586
    %v654 = vpop.f32.mrf.mxu0
    %v655 = vadd.f32 %v104, %v654
    %v656 = vpop.f32.mrf.mxu0
    %657 = vdwg.mxu0
    %659 = vrot.lane.b32.xlu0 %v486, 32
    %v660 = vpop.permute.xlu0 %659
    %v661 = vsel %vm109, %v660, 0
    %663 = vmatprep.subr.mxu0 0.0
    %664 = vmatpush1.msra.mxu0 0.0
    %665 = vmatprep.subr.mxu0 0.0
    %666 = vmatpush1.msra.mxu0 0.0
    %667 = vmatprep.subr.mxu0 0.0
    %668 = vmatpush1.msra.mxu0 0.0
    %669 = vmatprep.subr.mxu0 0.0
    %670 = vmatpush1.msra.mxu0 0.0
    %671 = vmatprep.subr.mxu0 0.0
    %672 = vmatpush1.msra.mxu0 0.0
    %673 = vmatprep.subr.mxu0 0.0
    %674 = vmatpush1.msra.mxu0 0.0
    %675 = vmatprep.subr.mxu0 0.0
    %676 = vmatpush1.msra.mxu0 0.0
    %677 = vmatprep.subr.mxu0 0.0
    %678 = vmatpush1.msra.mxu0 0.0
    %679 = vmatprep.subr.mxu0 0.0
    %680 = vmatpush1.msra.mxu0 0.0
    %681 = vmatprep.subr.mxu0 0.0
    %682 = vmatpush1.msra.mxu0 0.0
    %683 = vmatprep.subr.mxu0 0.0
    %684 = vmatpush1.msra.mxu0 0.0
    %685 = vmatprep.subr.mxu0 0.0
    %686 = vmatpush1.msra.mxu0 0.0
    %687 = vmatprep.subr.mxu0 0.0
    %688 = vmatpush1.msra.mxu0 %v382
    %689 = vmatprep.subr.mxu0 0.0
    %690 = vmatpush1.msra.mxu0 %v381
    %691 = vmatprep.subr.mxu0 0.0
    %692 = vmatpush1.msra.mxu0 %v380
    %693 = vmatprep.subr.mxu0 0.0
    %694 = vmatpush1.msra.mxu0 %v379
    %695 = vmatprep.subr.mxu0 0.0
    %696 = vmatpush2.msra.mxu0 0.0
    %697 = vmatprep.subr.mxu0 0.0
    %698 = vmatpush2.msra.mxu0 0.0
    %699 = vmatprep.subr.mxu0 0.0
    %700 = vmatpush2.msra.mxu0 0.0
    %701 = vmatprep.subr.mxu0 0.0
    %702 = vmatpush2.msra.mxu0 0.0
    %703 = vmatprep.subr.mxu0 0.0
    %704 = vmatpush2.msra.mxu0 0.0
    %705 = vmatprep.subr.mxu0 0.0
    %706 = vmatpush2.msra.mxu0 0.0
    %707 = vmatprep.subr.mxu0 0.0
    %708 = vmatpush2.msra.mxu0 0.0
    %709 = vmatprep.subr.mxu0 0.0
    %710 = vmatpush2.msra.mxu0 0.0
    %711 = vmatprep.subr.mxu0 0.0
    %712 = vmatpush2.msra.mxu0 0.0
    %713 = vmatprep.subr.mxu0 0.0
    %714 = vmatpush2.msra.mxu0 0.0
    %715 = vmatprep.subr.mxu0 0.0
    %716 = vmatpush2.msra.mxu0 0.0
    %717 = vmatprep.subr.mxu0 0.0
    %718 = vmatpush2.msra.mxu0 0.0
    %719 = vmatprep.subr.mxu0 0.0
    %720 = vmatpush2.msra.mxu0 0.0
    %721 = vmatprep.subr.mxu0 0.0
    %722 = vmatpush2.msra.mxu0 0.0
    %723 = vmatprep.subr.mxu0 0.0
    %724 = vmatpush2.msra.mxu0 0.0
    %725 = vmatprep.subr.mxu0 0.0
    %726 = vmatpush2.msra.mxu0 0.0
    %727 = vmatprep.mubr.f32.mxu0 0.0
    %728 = vmatmul.mubr.f32.gmra.mxu0 %v661
    %v729 = vpop.f32.mrf.mxu0
    %v730 = vadd.f32 0.0, %v729
    %v731 = vpop.f32.mrf.mxu0
    %732 = vdwg.mxu0
    %v733 = vadd.f32 %v655, %v730
    %v734 = vxor.u32 %v733, 2147483648
    %v735 = vmul.f32 %v734, 1.442695
    %v736 = vpow.pop %v735
    %v737 = vadd.f32 %v736, 1.0
    %v738 = vrcp.pop %v737
    %v739 = vmul.f32 1.0, %v738
    %v740 = vtanh.pop %v733
    %v741 = vmul.f32 %v739, %v480
    %743 = vrot.lane.b32.xlu0 %v740, 64
    %v744 = vpop.permute.xlu0 %743
    %v746 = vmul.f32 %v739, %v744
    %748 = vrot.lane.b32.xlu0 %v746, 32
    %v749 = vpop.permute.xlu0 %748
    %v751 = vadd.f32 %v741, %v749
    %v752 = vtanh.pop %v751
    %754 = vrot.lane.b32.xlu0 %v752, 64
    %v755 = vpop.permute.xlu0 %754
    %v757 = vmul.f32 %v739, %v755
    %v758 = vld [vmem:[#allocation2 + $0x18] sm:$0xff]
    %759 = vmatprep.subr.mxu0 0.0
    %760 = vmatpush1.msra.mxu0 0.0
    %761 = vmatprep.subr.mxu0 0.0
    %762 = vmatpush1.msra.mxu0 0.0
    %763 = vmatprep.subr.mxu0 0.0
    %764 = vmatpush1.msra.mxu0 0.0
    %765 = vmatprep.subr.mxu0 0.0
    %766 = vmatpush1.msra.mxu0 0.0
    %767 = vmatprep.subr.mxu0 0.0
    %768 = vmatpush1.msra.mxu0 0.0
    %769 = vmatprep.subr.mxu0 0.0
    %770 = vmatpush1.msra.mxu0 0.0
    %771 = vmatprep.subr.mxu0 0.0
    %772 = vmatpush1.msra.mxu0 0.0
    %773 = vmatprep.subr.mxu0 0.0
    %774 = vmatpush1.msra.mxu0 0.0
    %775 = vmatprep.subr.mxu0 0.0
    %776 = vmatpush1.msra.mxu0 0.0
    %777 = vmatprep.subr.mxu0 0.0
    %778 = vmatpush1.msra.mxu0 0.0
    %779 = vmatprep.subr.mxu0 0.0
    %780 = vmatpush1.msra.mxu0 0.0
    %781 = vmatprep.subr.mxu0 0.0
    %782 = vmatpush1.msra.mxu0 0.0
    %783 = vmatprep.subr.mxu0 0.0
    %784 = vmatpush1.msra.mxu0 %v204
    %785 = vmatprep.subr.mxu0 0.0
    %786 = vmatpush1.msra.mxu0 %v203
    %787 = vmatprep.subr.mxu0 0.0
    %788 = vmatpush1.msra.mxu0 %v202
    %789 = vmatprep.subr.mxu0 0.0
    %790 = vmatpush1.msra.mxu0 %v201
    %791 = vmatprep.subr.mxu0 0.0
    %792 = vmatpush2.msra.mxu0 0.0
    %793 = vmatprep.subr.mxu0 0.0
    %794 = vmatpush2.msra.mxu0 0.0
    %795 = vmatprep.subr.mxu0 0.0
    %796 = vmatpush2.msra.mxu0 0.0
    %797 = vmatprep.subr.mxu0 0.0
    %798 = vmatpush2.msra.mxu0 0.0
    %799 = vmatprep.subr.mxu0 0.0
    %800 = vmatpush2.msra.mxu0 0.0
    %801 = vmatprep.subr.mxu0 0.0
    %802 = vmatpush2.msra.mxu0 0.0
    %803 = vmatprep.subr.mxu0 0.0
    %804 = vmatpush2.msra.mxu0 0.0
    %805 = vmatprep.subr.mxu0 0.0
    %806 = vmatpush2.msra.mxu0 0.0
    %807 = vmatprep.subr.mxu0 0.0
    %808 = vmatpush2.msra.mxu0 0.0
    %809 = vmatprep.subr.mxu0 0.0
    %810 = vmatpush2.msra.mxu0 0.0
    %811 = vmatprep.subr.mxu0 0.0
    %812 = vmatpush2.msra.mxu0 0.0
    %813 = vmatprep.subr.mxu0 0.0
    %814 = vmatpush2.msra.mxu0 0.0
    %815 = vmatprep.subr.mxu0 0.0
    %816 = vmatpush2.msra.mxu0 0.0
    %817 = vmatprep.subr.mxu0 0.0
    %818 = vmatpush2.msra.mxu0 0.0
    %819 = vmatprep.subr.mxu0 0.0
    %820 = vmatpush2.msra.mxu0 0.0
    %821 = vmatprep.subr.mxu0 0.0
    %822 = vmatpush2.msra.mxu0 0.0
    %823 = vmatprep.mubr.f32.mxu0 0.0
    %824 = vmatmul.mubr.f32.gmra.mxu0 %v586
    %v825 = vpop.f32.mrf.mxu0
    %v826 = vadd.f32 0.0, %v825
    %v827 = vpop.f32.mrf.mxu0
    %828 = vdwg.mxu0
    %v829 = vadd.f32 %v758, %v826
    %v830 = vxor.u32 %v829, 2147483648
    %v831 = vmul.f32 %v830, 1.442695
    %v832 = vpow.pop %v831
    %v833 = vadd.f32 %v832, 1.0
    %v834 = vrcp.pop %v833
    %v835 = vmul.f32 1.0, %v834
    %v836 = vtanh.pop %v829
    %v837 = vmul.f32 %v835, %v576
    %839 = vrot.lane.b32.xlu0 %v836, 64
    %v840 = vpop.permute.xlu0 %839
    %v842 = vmul.f32 %v835, %v840
    %844 = vrot.lane.b32.xlu0 %v842, 32
    %v845 = vpop.permute.xlu0 %844
    %v847 = vadd.f32 %v837, %v845
    %v848 = vtanh.pop %v847
    %850 = vrot.lane.b32.xlu0 %v848, 64
    %v851 = vpop.permute.xlu0 %850
    %v853 = vmul.f32 %v835, %v851
    %855 = vrot.lane.b32.xlu0 %v853, 32
    %v856 = vpop.permute.xlu0 %855
    %v857 = vsel %vm109, %v856, 0
    %859 = vmatprep.subr.mxu0 0.0
    %860 = vmatpush1.msra.mxu0 0.0
    %861 = vmatprep.subr.mxu0 0.0
    %862 = vmatpush1.msra.mxu0 0.0
    %863 = vmatprep.subr.mxu0 0.0
    %864 = vmatpush1.msra.mxu0 0.0
    %865 = vmatprep.subr.mxu0 0.0
    %866 = vmatpush1.msra.mxu0 0.0
    %867 = vmatprep.subr.mxu0 0.0
    %868 = vmatpush1.msra.mxu0 0.0
    %869 = vmatprep.subr.mxu0 0.0
    %870 = vmatpush1.msra.mxu0 0.0
    %871 = vmatprep.subr.mxu0 0.0
    %872 = vmatpush1.msra.mxu0 0.0
    %873 = vmatprep.subr.mxu0 0.0
    %874 = vmatpush1.msra.mxu0 0.0
    %875 = vmatprep.subr.mxu0 0.0
    %876 = vmatpush1.msra.mxu0 0.0
    %877 = vmatprep.subr.mxu0 0.0
    %878 = vmatpush1.msra.mxu0 0.0
    %879 = vmatprep.subr.mxu0 0.0
    %880 = vmatpush1.msra.mxu0 0.0
    %881 = vmatprep.subr.mxu0 0.0
    %882 = vmatpush1.msra.mxu0 0.0
    %883 = vmatprep.subr.mxu0 0.0
    %884 = vmatpush1.msra.mxu0 %v98
    %885 = vmatprep.subr.mxu0 0.0
    %886 = vmatpush1.msra.mxu0 %v97
    %887 = vmatprep.subr.mxu0 0.0
    %888 = vmatpush1.msra.mxu0 %v96
    %889 = vmatprep.subr.mxu0 0.0
    %890 = vmatpush1.msra.mxu0 %v95
    %891 = vmatprep.subr.mxu0 0.0
    %892 = vmatpush2.msra.mxu0 0.0
    %893 = vmatprep.subr.mxu0 0.0
    %894 = vmatpush2.msra.mxu0 0.0
    %895 = vmatprep.subr.mxu0 0.0
    %896 = vmatpush2.msra.mxu0 0.0
    %897 = vmatprep.subr.mxu0 0.0
    %898 = vmatpush2.msra.mxu0 0.0
    %899 = vmatprep.subr.mxu0 0.0
    %900 = vmatpush2.msra.mxu0 0.0
    %901 = vmatprep.subr.mxu0 0.0
    %902 = vmatpush2.msra.mxu0 0.0
    %903 = vmatprep.subr.mxu0 0.0
    %904 = vmatpush2.msra.mxu0 0.0
    %905 = vmatprep.subr.mxu0 0.0
    %906 = vmatpush2.msra.mxu0 0.0
    %907 = vmatprep.subr.mxu0 0.0
    %908 = vmatpush2.msra.mxu0 0.0
    %909 = vmatprep.subr.mxu0 0.0
    %910 = vmatpush2.msra.mxu0 0.0
    %911 = vmatprep.subr.mxu0 0.0
    %912 = vmatpush2.msra.mxu0 0.0
    %913 = vmatprep.subr.mxu0 0.0
    %914 = vmatpush2.msra.mxu0 0.0
    %915 = vmatprep.subr.mxu0 0.0
    %916 = vmatpush2.msra.mxu0 0.0
    %917 = vmatprep.subr.mxu0 0.0
    %918 = vmatpush2.msra.mxu0 0.0
    %919 = vmatprep.subr.mxu0 0.0
    %920 = vmatpush2.msra.mxu0 0.0
    %921 = vmatprep.subr.mxu0 0.0
    %922 = vmatpush2.msra.mxu0 0.0
    %923 = vmatprep.mubr.f32.mxu0 0.0
    %924 = vmatmul.mubr.f32.gmra.mxu0 %v857
    %v925 = vpop.f32.mrf.mxu0
    %v926 = vadd.f32 %v104, %v925
    %v927 = vpop.f32.mrf.mxu0
    %928 = vdwg.mxu0
    %930 = vrot.lane.b32.xlu0 %v757, 32
    %v931 = vpop.permute.xlu0 %930
    %v932 = vsel %vm109, %v931, 0
    %934 = vmatprep.subr.mxu0 0.0
    %935 = vmatpush1.msra.mxu0 0.0
    %936 = vmatprep.subr.mxu0 0.0
    %937 = vmatpush1.msra.mxu0 0.0
    %938 = vmatprep.subr.mxu0 0.0
    %939 = vmatpush1.msra.mxu0 0.0
    %940 = vmatprep.subr.mxu0 0.0
    %941 = vmatpush1.msra.mxu0 0.0
    %942 = vmatprep.subr.mxu0 0.0
    %943 = vmatpush1.msra.mxu0 0.0
    %944 = vmatprep.subr.mxu0 0.0
    %945 = vmatpush1.msra.mxu0 0.0
    %946 = vmatprep.subr.mxu0 0.0
    %947 = vmatpush1.msra.mxu0 0.0
    %948 = vmatprep.subr.mxu0 0.0
    %949 = vmatpush1.msra.mxu0 0.0
    %950 = vmatprep.subr.mxu0 0.0
    %951 = vmatpush1.msra.mxu0 0.0
    %952 = vmatprep.subr.mxu0 0.0
    %953 = vmatpush1.msra.mxu0 0.0
    %954 = vmatprep.subr.mxu0 0.0
    %955 = vmatpush1.msra.mxu0 0.0
    %956 = vmatprep.subr.mxu0 0.0
    %957 = vmatpush1.msra.mxu0 0.0
    %958 = vmatprep.subr.mxu0 0.0
    %959 = vmatpush1.msra.mxu0 %v382
    %960 = vmatprep.subr.mxu0 0.0
    %961 = vmatpush1.msra.mxu0 %v381
    %962 = vmatprep.subr.mxu0 0.0
    %963 = vmatpush1.msra.mxu0 %v380
    %964 = vmatprep.subr.mxu0 0.0
    %965 = vmatpush1.msra.mxu0 %v379
    %966 = vmatprep.subr.mxu0 0.0
    %967 = vmatpush2.msra.mxu0 0.0
    %968 = vmatprep.subr.mxu0 0.0
    %969 = vmatpush2.msra.mxu0 0.0
    %970 = vmatprep.subr.mxu0 0.0
    %971 = vmatpush2.msra.mxu0 0.0
    %972 = vmatprep.subr.mxu0 0.0
    %973 = vmatpush2.msra.mxu0 0.0
    %974 = vmatprep.subr.mxu0 0.0
    %975 = vmatpush2.msra.mxu0 0.0
    %976 = vmatprep.subr.mxu0 0.0
    %977 = vmatpush2.msra.mxu0 0.0
    %978 = vmatprep.subr.mxu0 0.0
    %979 = vmatpush2.msra.mxu0 0.0
    %980 = vmatprep.subr.mxu0 0.0
    %981 = vmatpush2.msra.mxu0 0.0
    %982 = vmatprep.subr.mxu0 0.0
    %983 = vmatpush2.msra.mxu0 0.0
    %984 = vmatprep.subr.mxu0 0.0
    %985 = vmatpush2.msra.mxu0 0.0
    %986 = vmatprep.subr.mxu0 0.0
    %987 = vmatpush2.msra.mxu0 0.0
    %988 = vmatprep.subr.mxu0 0.0
    %989 = vmatpush2.msra.mxu0 0.0
    %990 = vmatprep.subr.mxu0 0.0
    %991 = vmatpush2.msra.mxu0 0.0
    %992 = vmatprep.subr.mxu0 0.0
    %993 = vmatpush2.msra.mxu0 0.0
    %994 = vmatprep.subr.mxu0 0.0
    %995 = vmatpush2.msra.mxu0 0.0
    %996 = vmatprep.subr.mxu0 0.0
    %997 = vmatpush2.msra.mxu0 0.0
    %998 = vmatprep.mubr.f32.mxu0 0.0
    %999 = vmatmul.mubr.f32.gmra.mxu0 %v932
    %v1000 = vpop.f32.mrf.mxu0
    %v1001 = vadd.f32 0.0, %v1000
    %v1002 = vpop.f32.mrf.mxu0
    %1003 = vdwg.mxu0
    %v1004 = vadd.f32 %v926, %v1001
    %v1005 = vxor.u32 %v1004, 2147483648
    %v1006 = vmul.f32 %v1005, 1.442695
    %v1007 = vpow.pop %v1006
    %v1008 = vadd.f32 %v1007, 1.0
    %v1009 = vrcp.pop %v1008
    %v1010 = vmul.f32 1.0, %v1009
    %v1011 = vtanh.pop %v1004
    %v1012 = vmul.f32 %v1010, %v751
    %1014 = vrot.lane.b32.xlu0 %v1011, 64
    %v1015 = vpop.permute.xlu0 %1014
    %v1017 = vmul.f32 %v1010, %v1015
    %1019 = vrot.lane.b32.xlu0 %v1017, 32
    %v1020 = vpop.permute.xlu0 %1019
    %v1022 = vadd.f32 %v1012, %v1020
    %v1023 = vtanh.pop %v1022
    %1025 = vrot.lane.b32.xlu0 %v1023, 64
    %v1026 = vpop.permute.xlu0 %1025
    %v1028 = vmul.f32 %v1010, %v1026
    %v1029 = vld [vmem:[#allocation2 + $0x20] sm:$0xff]
    %1030 = vmatprep.subr.mxu0 0.0
    %1031 = vmatpush1.msra.mxu0 0.0
    %1032 = vmatprep.subr.mxu0 0.0
    %1033 = vmatpush1.msra.mxu0 0.0
    %1034 = vmatprep.subr.mxu0 0.0
    %1035 = vmatpush1.msra.mxu0 0.0
    %1036 = vmatprep.subr.mxu0 0.0
    %1037 = vmatpush1.msra.mxu0 0.0
    %1038 = vmatprep.subr.mxu0 0.0
    %1039 = vmatpush1.msra.mxu0 0.0
    %1040 = vmatprep.subr.mxu0 0.0
    %1041 = vmatpush1.msra.mxu0 0.0
    %1042 = vmatprep.subr.mxu0 0.0
    %1043 = vmatpush1.msra.mxu0 0.0
    %1044 = vmatprep.subr.mxu0 0.0
    %1045 = vmatpush1.msra.mxu0 0.0
    %1046 = vmatprep.subr.mxu0 0.0
    %1047 = vmatpush1.msra.mxu0 0.0
    %1048 = vmatprep.subr.mxu0 0.0
    %1049 = vmatpush1.msra.mxu0 0.0
    %1050 = vmatprep.subr.mxu0 0.0
    %1051 = vmatpush1.msra.mxu0 0.0
    %1052 = vmatprep.subr.mxu0 0.0
    %1053 = vmatpush1.msra.mxu0 0.0
    %1054 = vmatprep.subr.mxu0 0.0
    %1055 = vmatpush1.msra.mxu0 %v204
    %1056 = vmatprep.subr.mxu0 0.0
    %1057 = vmatpush1.msra.mxu0 %v203
    %1058 = vmatprep.subr.mxu0 0.0
    %1059 = vmatpush1.msra.mxu0 %v202
    %1060 = vmatprep.subr.mxu0 0.0
    %1061 = vmatpush1.msra.mxu0 %v201
    %1062 = vmatprep.subr.mxu0 0.0
    %1063 = vmatpush2.msra.mxu0 0.0
    %1064 = vmatprep.subr.mxu0 0.0
    %1065 = vmatpush2.msra.mxu0 0.0
    %1066 = vmatprep.subr.mxu0 0.0
    %1067 = vmatpush2.msra.mxu0 0.0
    %1068 = vmatprep.subr.mxu0 0.0
    %1069 = vmatpush2.msra.mxu0 0.0
    %1070 = vmatprep.subr.mxu0 0.0
    %1071 = vmatpush2.msra.mxu0 0.0
    %1072 = vmatprep.subr.mxu0 0.0
    %1073 = vmatpush2.msra.mxu0 0.0
    %1074 = vmatprep.subr.mxu0 0.0
    %1075 = vmatpush2.msra.mxu0 0.0
    %1076 = vmatprep.subr.mxu0 0.0
    %1077 = vmatpush2.msra.mxu0 0.0
    %1078 = vmatprep.subr.mxu0 0.0
    %1079 = vmatpush2.msra.mxu0 0.0
    %1080 = vmatprep.subr.mxu0 0.0
    %1081 = vmatpush2.msra.mxu0 0.0
    %1082 = vmatprep.subr.mxu0 0.0
    %1083 = vmatpush2.msra.mxu0 0.0
    %1084 = vmatprep.subr.mxu0 0.0
    %1085 = vmatpush2.msra.mxu0 0.0
    %1086 = vmatprep.subr.mxu0 0.0
    %1087 = vmatpush2.msra.mxu0 0.0
    %1088 = vmatprep.subr.mxu0 0.0
    %1089 = vmatpush2.msra.mxu0 0.0
    %1090 = vmatprep.subr.mxu0 0.0
    %1091 = vmatpush2.msra.mxu0 0.0
    %1092 = vmatprep.subr.mxu0 0.0
    %1093 = vmatpush2.msra.mxu0 0.0
    %1094 = vmatprep.mubr.f32.mxu0 0.0
    %1095 = vmatmul.mubr.f32.gmra.mxu0 %v857
    %v1096 = vpop.f32.mrf.mxu0
    %v1097 = vadd.f32 0.0, %v1096
    %v1098 = vpop.f32.mrf.mxu0
    %1099 = vdwg.mxu0
    %v1100 = vadd.f32 %v1029, %v1097
    %v1101 = vxor.u32 %v1100, 2147483648
    %v1102 = vmul.f32 %v1101, 1.442695
    %v1103 = vpow.pop %v1102
    %v1104 = vadd.f32 %v1103, 1.0
    %v1105 = vrcp.pop %v1104
    %v1106 = vmul.f32 1.0, %v1105
    %v1107 = vtanh.pop %v1100
    %v1108 = vmul.f32 %v1106, %v847
    %1110 = vrot.lane.b32.xlu0 %v1107, 64
    %v1111 = vpop.permute.xlu0 %1110
    %v1113 = vmul.f32 %v1106, %v1111
    %1115 = vrot.lane.b32.xlu0 %v1113, 32
    %v1116 = vpop.permute.xlu0 %1115
    %v1118 = vadd.f32 %v1108, %v1116
    %v1119 = vtanh.pop %v1118
    %1121 = vrot.lane.b32.xlu0 %v1119, 64
    %v1122 = vpop.permute.xlu0 %1121
    %v1124 = vmul.f32 %v1106, %v1122
    %1126 = vrot.lane.b32.xlu0 %v1124, 32
    %v1127 = vpop.permute.xlu0 %1126
    %v1128 = vsel %vm109, %v1127, 0
    %1130 = vmatprep.subr.mxu0 0.0
    %1131 = vmatpush1.msra.mxu0 0.0
    %1132 = vmatprep.subr.mxu0 0.0
    %1133 = vmatpush1.msra.mxu0 0.0
    %1134 = vmatprep.subr.mxu0 0.0
    %1135 = vmatpush1.msra.mxu0 0.0
    %1136 = vmatprep.subr.mxu0 0.0
    %1137 = vmatpush1.msra.mxu0 0.0
    %1138 = vmatprep.subr.mxu0 0.0
    %1139 = vmatpush1.msra.mxu0 0.0
    %1140 = vmatprep.subr.mxu0 0.0
    %1141 = vmatpush1.msra.mxu0 0.0
    %1142 = vmatprep.subr.mxu0 0.0
    %1143 = vmatpush1.msra.mxu0 0.0
    %1144 = vmatprep.subr.mxu0 0.0
    %1145 = vmatpush1.msra.mxu0 0.0
    %1146 = vmatprep.subr.mxu0 0.0
    %1147 = vmatpush1.msra.mxu0 0.0
    %1148 = vmatprep.subr.mxu0 0.0
    %1149 = vmatpush1.msra.mxu0 0.0
    %1150 = vmatprep.subr.mxu0 0.0
    %1151 = vmatpush1.msra.mxu0 0.0
    %1152 = vmatprep.subr.mxu0 0.0
    %1153 = vmatpush1.msra.mxu0 0.0
    %1154 = vmatprep.subr.mxu0 0.0
    %1155 = vmatpush1.msra.mxu0 %v98
    %1156 = vmatprep.subr.mxu0 0.0
    %1157 = vmatpush1.msra.mxu0 %v97
    %1158 = vmatprep.subr.mxu0 0.0
    %1159 = vmatpush1.msra.mxu0 %v96
    %1160 = vmatprep.subr.mxu0 0.0
    %1161 = vmatpush1.msra.mxu0 %v95
    %1162 = vmatprep.subr.mxu0 0.0
    %1163 = vmatpush2.msra.mxu0 0.0
    %1164 = vmatprep.subr.mxu0 0.0
    %1165 = vmatpush2.msra.mxu0 0.0
    %1166 = vmatprep.subr.mxu0 0.0
    %1167 = vmatpush2.msra.mxu0 0.0
    %1168 = vmatprep.subr.mxu0 0.0
    %1169 = vmatpush2.msra.mxu0 0.0
    %1170 = vmatprep.subr.mxu0 0.0
    %1171 = vmatpush2.msra.mxu0 0.0
    %1172 = vmatprep.subr.mxu0 0.0
    %1173 = vmatpush2.msra.mxu0 0.0
    %1174 = vmatprep.subr.mxu0 0.0
    %1175 = vmatpush2.msra.mxu0 0.0
    %1176 = vmatprep.subr.mxu0 0.0
    %1177 = vmatpush2.msra.mxu0 0.0
    %1178 = vmatprep.subr.mxu0 0.0
    %1179 = vmatpush2.msra.mxu0 0.0
    %1180 = vmatprep.subr.mxu0 0.0
    %1181 = vmatpush2.msra.mxu0 0.0
    %1182 = vmatprep.subr.mxu0 0.0
    %1183 = vmatpush2.msra.mxu0 0.0
    %1184 = vmatprep.subr.mxu0 0.0
    %1185 = vmatpush2.msra.mxu0 0.0
    %1186 = vmatprep.subr.mxu0 0.0
    %1187 = vmatpush2.msra.mxu0 0.0
    %1188 = vmatprep.subr.mxu0 0.0
    %1189 = vmatpush2.msra.mxu0 0.0
    %1190 = vmatprep.subr.mxu0 0.0
    %1191 = vmatpush2.msra.mxu0 0.0
    %1192 = vmatprep.subr.mxu0 0.0
    %1193 = vmatpush2.msra.mxu0 0.0
    %1194 = vmatprep.mubr.f32.mxu0 0.0
    %1195 = vmatmul.mubr.f32.gmra.mxu0 %v1128
    %v1196 = vpop.f32.mrf.mxu0
    %v1197 = vadd.f32 %v104, %v1196
    %v1198 = vpop.f32.mrf.mxu0
    %1199 = vdwg.mxu0
    %1201 = vrot.lane.b32.xlu0 %v1028, 32
    %v1202 = vpop.permute.xlu0 %1201
    %v1203 = vsel %vm109, %v1202, 0
    %1205 = vmatprep.subr.mxu0 0.0
    %1206 = vmatpush1.msra.mxu0 0.0
    %1207 = vmatprep.subr.mxu0 0.0
    %1208 = vmatpush1.msra.mxu0 0.0
    %1209 = vmatprep.subr.mxu0 0.0
    %1210 = vmatpush1.msra.mxu0 0.0
    %1211 = vmatprep.subr.mxu0 0.0
    %1212 = vmatpush1.msra.mxu0 0.0
    %1213 = vmatprep.subr.mxu0 0.0
    %1214 = vmatpush1.msra.mxu0 0.0
    %1215 = vmatprep.subr.mxu0 0.0
    %1216 = vmatpush1.msra.mxu0 0.0
    %1217 = vmatprep.subr.mxu0 0.0
    %1218 = vmatpush1.msra.mxu0 0.0
    %1219 = vmatprep.subr.mxu0 0.0
    %1220 = vmatpush1.msra.mxu0 0.0
    %1221 = vmatprep.subr.mxu0 0.0
    %1222 = vmatpush1.msra.mxu0 0.0
    %1223 = vmatprep.subr.mxu0 0.0
    %1224 = vmatpush1.msra.mxu0 0.0
    %1225 = vmatprep.subr.mxu0 0.0
    %1226 = vmatpush1.msra.mxu0 0.0
    %1227 = vmatprep.subr.mxu0 0.0
    %1228 = vmatpush1.msra.mxu0 0.0
    %1229 = vmatprep.subr.mxu0 0.0
    %1230 = vmatpush1.msra.mxu0 %v382
    %1231 = vmatprep.subr.mxu0 0.0
    %1232 = vmatpush1.msra.mxu0 %v381
    %1233 = vmatprep.subr.mxu0 0.0
    %1234 = vmatpush1.msra.mxu0 %v380
    %1235 = vmatprep.subr.mxu0 0.0
    %1236 = vmatpush1.msra.mxu0 %v379
    %1237 = vmatprep.subr.mxu0 0.0
    %1238 = vmatpush2.msra.mxu0 0.0
    %1239 = vmatprep.subr.mxu0 0.0
    %1240 = vmatpush2.msra.mxu0 0.0
    %1241 = vmatprep.subr.mxu0 0.0
    %1242 = vmatpush2.msra.mxu0 0.0
    %1243 = vmatprep.subr.mxu0 0.0
    %1244 = vmatpush2.msra.mxu0 0.0
    %1245 = vmatprep.subr.mxu0 0.0
    %1246 = vmatpush2.msra.mxu0 0.0
    %1247 = vmatprep.subr.mxu0 0.0
    %1248 = vmatpush2.msra.mxu0 0.0
    %1249 = vmatprep.subr.mxu0 0.0
    %1250 = vmatpush2.msra.mxu0 0.0
    %1251 = vmatprep.subr.mxu0 0.0
    %1252 = vmatpush2.msra.mxu0 0.0
    %1253 = vmatprep.subr.mxu0 0.0
    %1254 = vmatpush2.msra.mxu0 0.0
    %1255 = vmatprep.subr.mxu0 0.0
    %1256 = vmatpush2.msra.mxu0 0.0
    %1257 = vmatprep.subr.mxu0 0.0
    %1258 = vmatpush2.msra.mxu0 0.0
    %1259 = vmatprep.subr.mxu0 0.0
    %1260 = vmatpush2.msra.mxu0 0.0
    %1261 = vmatprep.subr.mxu0 0.0
    %1262 = vmatpush2.msra.mxu0 0.0
    %1263 = vmatprep.subr.mxu0 0.0
    %1264 = vmatpush2.msra.mxu0 0.0
    %1265 = vmatprep.subr.mxu0 0.0
    %1266 = vmatpush2.msra.mxu0 0.0
    %1267 = vmatprep.subr.mxu0 0.0
    %1268 = vmatpush2.msra.mxu0 0.0
    %1269 = vmatprep.mubr.f32.mxu0 0.0
    %1270 = vmatmul.mubr.f32.gmra.mxu0 %v1203
    %v1271 = vpop.f32.mrf.mxu0
    %v1272 = vadd.f32 0.0, %v1271
    %v1273 = vpop.f32.mrf.mxu0
    %1274 = vdwg.mxu0
    %v1275 = vadd.f32 %v1197, %v1272
    %v1276 = vxor.u32 %v1275, 2147483648
    %v1277 = vmul.f32 %v1276, 1.442695
    %v1278 = vpow.pop %v1277
    %v1279 = vadd.f32 %v1278, 1.0
    %v1280 = vrcp.pop %v1279
    %v1281 = vmul.f32 1.0, %v1280
    %v1282 = vtanh.pop %v1275
    %v1283 = vmul.f32 %v1281, %v1022
    %1285 = vrot.lane.b32.xlu0 %v1282, 64
    %v1286 = vpop.permute.xlu0 %1285
    %v1288 = vmul.f32 %v1281, %v1286
    %1290 = vrot.lane.b32.xlu0 %v1288, 32
    %v1291 = vpop.permute.xlu0 %1290
    %v1293 = vadd.f32 %v1283, %v1291
    %v1294 = vtanh.pop %v1293
    %1296 = vrot.lane.b32.xlu0 %v1294, 64
    %v1297 = vpop.permute.xlu0 %1296
    %v1299 = vmul.f32 %v1281, %v1297
    %v1300 = vld [vmem:[#allocation2 + $0x28] sm:$0xff]
    %1301 = vmatprep.subr.mxu0 0.0
    %1302 = vmatpush1.msra.mxu0 0.0
    %1303 = vmatprep.subr.mxu0 0.0
    %1304 = vmatpush1.msra.mxu0 0.0
    %1305 = vmatprep.subr.mxu0 0.0
    %1306 = vmatpush1.msra.mxu0 0.0
    %1307 = vmatprep.subr.mxu0 0.0
    %1308 = vmatpush1.msra.mxu0 0.0
    %1309 = vmatprep.subr.mxu0 0.0
    %1310 = vmatpush1.msra.mxu0 0.0
    %1311 = vmatprep.subr.mxu0 0.0
    %1312 = vmatpush1.msra.mxu0 0.0
    %1313 = vmatprep.subr.mxu0 0.0
    %1314 = vmatpush1.msra.mxu0 0.0
    %1315 = vmatprep.subr.mxu0 0.0
    %1316 = vmatpush1.msra.mxu0 0.0
    %1317 = vmatprep.subr.mxu0 0.0
    %1318 = vmatpush1.msra.mxu0 0.0
    %1319 = vmatprep.subr.mxu0 0.0
    %1320 = vmatpush1.msra.mxu0 0.0
    %1321 = vmatprep.subr.mxu0 0.0
    %1322 = vmatpush1.msra.mxu0 0.0
    %1323 = vmatprep.subr.mxu0 0.0
    %1324 = vmatpush1.msra.mxu0 0.0
    %1325 = vmatprep.subr.mxu0 0.0
    %1326 = vmatpush1.msra.mxu0 %v204
    %1327 = vmatprep.subr.mxu0 0.0
    %1328 = vmatpush1.msra.mxu0 %v203
    %1329 = vmatprep.subr.mxu0 0.0
    %1330 = vmatpush1.msra.mxu0 %v202
    %1331 = vmatprep.subr.mxu0 0.0
    %1332 = vmatpush1.msra.mxu0 %v201
    %1333 = vmatprep.subr.mxu0 0.0
    %1334 = vmatpush2.msra.mxu0 0.0
    %1335 = vmatprep.subr.mxu0 0.0
    %1336 = vmatpush2.msra.mxu0 0.0
    %1337 = vmatprep.subr.mxu0 0.0
    %1338 = vmatpush2.msra.mxu0 0.0
    %1339 = vmatprep.subr.mxu0 0.0
    %1340 = vmatpush2.msra.mxu0 0.0
    %1341 = vmatprep.subr.mxu0 0.0
    %1342 = vmatpush2.msra.mxu0 0.0
    %1343 = vmatprep.subr.mxu0 0.0
    %1344 = vmatpush2.msra.mxu0 0.0
    %1345 = vmatprep.subr.mxu0 0.0
    %1346 = vmatpush2.msra.mxu0 0.0
    %1347 = vmatprep.subr.mxu0 0.0
    %1348 = vmatpush2.msra.mxu0 0.0
    %1349 = vmatprep.subr.mxu0 0.0
    %1350 = vmatpush2.msra.mxu0 0.0
    %1351 = vmatprep.subr.mxu0 0.0
    %1352 = vmatpush2.msra.mxu0 0.0
    %1353 = vmatprep.subr.mxu0 0.0
    %1354 = vmatpush2.msra.mxu0 0.0
    %1355 = vmatprep.subr.mxu0 0.0
    %1356 = vmatpush2.msra.mxu0 0.0
    %1357 = vmatprep.subr.mxu0 0.0
    %1358 = vmatpush2.msra.mxu0 0.0
    %1359 = vmatprep.subr.mxu0 0.0
    %1360 = vmatpush2.msra.mxu0 0.0
    %1361 = vmatprep.subr.mxu0 0.0
    %1362 = vmatpush2.msra.mxu0 0.0
    %1363 = vmatprep.subr.mxu0 0.0
    %1364 = vmatpush2.msra.mxu0 0.0
    %1365 = vmatprep.mubr.f32.mxu0 0.0
    %1366 = vmatmul.mubr.f32.gmra.mxu0 %v1128
    %v1367 = vpop.f32.mrf.mxu0
    %v1368 = vadd.f32 0.0, %v1367
    %v1369 = vpop.f32.mrf.mxu0
    %1370 = vdwg.mxu0
    %v1371 = vadd.f32 %v1300, %v1368
    %v1372 = vxor.u32 %v1371, 2147483648
    %v1373 = vmul.f32 %v1372, 1.442695
    %v1374 = vpow.pop %v1373
    %v1375 = vadd.f32 %v1374, 1.0
    %v1376 = vrcp.pop %v1375
    %v1377 = vmul.f32 1.0, %v1376
    %v1378 = vtanh.pop %v1371
    %v1379 = vmul.f32 %v1377, %v1118
    %1381 = vrot.lane.b32.xlu0 %v1378, 64
    %v1382 = vpop.permute.xlu0 %1381
    %v1384 = vmul.f32 %v1377, %v1382
    %1386 = vrot.lane.b32.xlu0 %v1384, 32
    %v1387 = vpop.permute.xlu0 %1386
    %v1389 = vadd.f32 %v1379, %v1387
    %v1390 = vtanh.pop %v1389
    %1392 = vrot.lane.b32.xlu0 %v1390, 64
    %v1393 = vpop.permute.xlu0 %1392
    %v1395 = vmul.f32 %v1377, %v1393
    %1397 = vrot.lane.b32.xlu0 %v1395, 32
    %v1398 = vpop.permute.xlu0 %1397
    %v1399 = vsel %vm109, %v1398, 0
    %1401 = vmatprep.subr.mxu0 0.0
    %1402 = vmatpush1.msra.mxu0 0.0
    %1403 = vmatprep.subr.mxu0 0.0
    %1404 = vmatpush1.msra.mxu0 0.0
    %1405 = vmatprep.subr.mxu0 0.0
    %1406 = vmatpush1.msra.mxu0 0.0
    %1407 = vmatprep.subr.mxu0 0.0
    %1408 = vmatpush1.msra.mxu0 0.0
    %1409 = vmatprep.subr.mxu0 0.0
    %1410 = vmatpush1.msra.mxu0 0.0
    %1411 = vmatprep.subr.mxu0 0.0
    %1412 = vmatpush1.msra.mxu0 0.0
    %1413 = vmatprep.subr.mxu0 0.0
    %1414 = vmatpush1.msra.mxu0 0.0
    %1415 = vmatprep.subr.mxu0 0.0
    %1416 = vmatpush1.msra.mxu0 0.0
    %1417 = vmatprep.subr.mxu0 0.0
    %1418 = vmatpush1.msra.mxu0 0.0
    %1419 = vmatprep.subr.mxu0 0.0
    %1420 = vmatpush1.msra.mxu0 0.0
    %1421 = vmatprep.subr.mxu0 0.0
    %1422 = vmatpush1.msra.mxu0 0.0
    %1423 = vmatprep.subr.mxu0 0.0
    %1424 = vmatpush1.msra.mxu0 0.0
    %1425 = vmatprep.subr.mxu0 0.0
    %1426 = vmatpush1.msra.mxu0 %v98
    %1427 = vmatprep.subr.mxu0 0.0
    %1428 = vmatpush1.msra.mxu0 %v97
    %1429 = vmatprep.subr.mxu0 0.0
    %1430 = vmatpush1.msra.mxu0 %v96
    %1431 = vmatprep.subr.mxu0 0.0
    %1432 = vmatpush1.msra.mxu0 %v95
    %1433 = vmatprep.subr.mxu0 0.0
    %1434 = vmatpush2.msra.mxu0 0.0
    %1435 = vmatprep.subr.mxu0 0.0
    %1436 = vmatpush2.msra.mxu0 0.0
    %1437 = vmatprep.subr.mxu0 0.0
    %1438 = vmatpush2.msra.mxu0 0.0
    %1439 = vmatprep.subr.mxu0 0.0
    %1440 = vmatpush2.msra.mxu0 0.0
    %1441 = vmatprep.subr.mxu0 0.0
    %1442 = vmatpush2.msra.mxu0 0.0
    %1443 = vmatprep.subr.mxu0 0.0
    %1444 = vmatpush2.msra.mxu0 0.0
    %1445 = vmatprep.subr.mxu0 0.0
    %1446 = vmatpush2.msra.mxu0 0.0
    %1447 = vmatprep.subr.mxu0 0.0
    %1448 = vmatpush2.msra.mxu0 0.0
    %1449 = vmatprep.subr.mxu0 0.0
    %1450 = vmatpush2.msra.mxu0 0.0
    %1451 = vmatprep.subr.mxu0 0.0
    %1452 = vmatpush2.msra.mxu0 0.0
    %1453 = vmatprep.subr.mxu0 0.0
    %1454 = vmatpush2.msra.mxu0 0.0
    %1455 = vmatprep.subr.mxu0 0.0
    %1456 = vmatpush2.msra.mxu0 0.0
    %1457 = vmatprep.subr.mxu0 0.0
    %1458 = vmatpush2.msra.mxu0 0.0
    %1459 = vmatprep.subr.mxu0 0.0
    %1460 = vmatpush2.msra.mxu0 0.0
    %1461 = vmatprep.subr.mxu0 0.0
    %1462 = vmatpush2.msra.mxu0 0.0
    %1463 = vmatprep.subr.mxu0 0.0
    %1464 = vmatpush2.msra.mxu0 0.0
    %1465 = vmatprep.mubr.f32.mxu0 0.0
    %1466 = vmatmul.mubr.f32.gmra.mxu0 %v1399
    %v1467 = vpop.f32.mrf.mxu0
    %v1468 = vadd.f32 %v104, %v1467
    %v1469 = vpop.f32.mrf.mxu0
    %1470 = vdwg.mxu0
    %1472 = vrot.lane.b32.xlu0 %v1299, 32
    %v1473 = vpop.permute.xlu0 %1472
    %v1474 = vsel %vm109, %v1473, 0
    %1476 = vmatprep.subr.mxu0 0.0
    %1477 = vmatpush1.msra.mxu0 0.0
    %1478 = vmatprep.subr.mxu0 0.0
    %1479 = vmatpush1.msra.mxu0 0.0
    %1480 = vmatprep.subr.mxu0 0.0
    %1481 = vmatpush1.msra.mxu0 0.0
    %1482 = vmatprep.subr.mxu0 0.0
    %1483 = vmatpush1.msra.mxu0 0.0
    %1484 = vmatprep.subr.mxu0 0.0
    %1485 = vmatpush1.msra.mxu0 0.0
    %1486 = vmatprep.subr.mxu0 0.0
    %1487 = vmatpush1.msra.mxu0 0.0
    %1488 = vmatprep.subr.mxu0 0.0
    %1489 = vmatpush1.msra.mxu0 0.0
    %1490 = vmatprep.subr.mxu0 0.0
    %1491 = vmatpush1.msra.mxu0 0.0
    %1492 = vmatprep.subr.mxu0 0.0
    %1493 = vmatpush1.msra.mxu0 0.0
    %1494 = vmatprep.subr.mxu0 0.0
    %1495 = vmatpush1.msra.mxu0 0.0
    %1496 = vmatprep.subr.mxu0 0.0
    %1497 = vmatpush1.msra.mxu0 0.0
    %1498 = vmatprep.subr.mxu0 0.0
    %1499 = vmatpush1.msra.mxu0 0.0
    %1500 = vmatprep.subr.mxu0 0.0
    %1501 = vmatpush1.msra.mxu0 %v382
    %1502 = vmatprep.subr.mxu0 0.0
    %1503 = vmatpush1.msra.mxu0 %v381
    %1504 = vmatprep.subr.mxu0 0.0
    %1505 = vmatpush1.msra.mxu0 %v380
    %1506 = vmatprep.subr.mxu0 0.0
    %1507 = vmatpush1.msra.mxu0 %v379
    %1508 = vmatprep.subr.mxu0 0.0
    %1509 = vmatpush2.msra.mxu0 0.0
    %1510 = vmatprep.subr.mxu0 0.0
    %1511 = vmatpush2.msra.mxu0 0.0
    %1512 = vmatprep.subr.mxu0 0.0
    %1513 = vmatpush2.msra.mxu0 0.0
    %1514 = vmatprep.subr.mxu0 0.0
    %1515 = vmatpush2.msra.mxu0 0.0
    %1516 = vmatprep.subr.mxu0 0.0
    %1517 = vmatpush2.msra.mxu0 0.0
    %1518 = vmatprep.subr.mxu0 0.0
    %1519 = vmatpush2.msra.mxu0 0.0
    %1520 = vmatprep.subr.mxu0 0.0
    %1521 = vmatpush2.msra.mxu0 0.0
    %1522 = vmatprep.subr.mxu0 0.0
    %1523 = vmatpush2.msra.mxu0 0.0
    %1524 = vmatprep.subr.mxu0 0.0
    %1525 = vmatpush2.msra.mxu0 0.0
    %1526 = vmatprep.subr.mxu0 0.0
    %1527 = vmatpush2.msra.mxu0 0.0
    %1528 = vmatprep.subr.mxu0 0.0
    %1529 = vmatpush2.msra.mxu0 0.0
    %1530 = vmatprep.subr.mxu0 0.0
    %1531 = vmatpush2.msra.mxu0 0.0
    %1532 = vmatprep.subr.mxu0 0.0
    %1533 = vmatpush2.msra.mxu0 0.0
    %1534 = vmatprep.subr.mxu0 0.0
    %1535 = vmatpush2.msra.mxu0 0.0
    %1536 = vmatprep.subr.mxu0 0.0
    %1537 = vmatpush2.msra.mxu0 0.0
    %1538 = vmatprep.subr.mxu0 0.0
    %1539 = vmatpush2.msra.mxu0 0.0
    %1540 = vmatprep.mubr.f32.mxu0 0.0
    %1541 = vmatmul.mubr.f32.gmra.mxu0 %v1474
    %v1542 = vpop.f32.mrf.mxu0
    %v1543 = vadd.f32 0.0, %v1542
    %v1544 = vpop.f32.mrf.mxu0
    %1545 = vdwg.mxu0
    %v1546 = vadd.f32 %v1468, %v1543
    %v1547 = vxor.u32 %v1546, 2147483648
    %v1548 = vmul.f32 %v1547, 1.442695
    %v1549 = vpow.pop %v1548
    %v1550 = vadd.f32 %v1549, 1.0
    %v1551 = vrcp.pop %v1550
    %v1552 = vmul.f32 1.0, %v1551
    %v1553 = vtanh.pop %v1546
    %v1554 = vmul.f32 %v1552, %v1293
    %1556 = vrot.lane.b32.xlu0 %v1553, 64
    %v1557 = vpop.permute.xlu0 %1556
    %v1559 = vmul.f32 %v1552, %v1557
    %1561 = vrot.lane.b32.xlu0 %v1559, 32
    %v1562 = vpop.permute.xlu0 %1561
    %v1564 = vadd.f32 %v1554, %v1562
    %v1565 = vtanh.pop %v1564
    %1567 = vrot.lane.b32.xlu0 %v1565, 64
    %v1568 = vpop.permute.xlu0 %1567
    %v1570 = vmul.f32 %v1552, %v1568
    %v1571 = vld [vmem:[#allocation2 + $0x30] sm:$0xff]
    %1572 = vmatprep.subr.mxu0 0.0
    %1573 = vmatpush1.msra.mxu0 0.0
    %1574 = vmatprep.subr.mxu0 0.0
    %1575 = vmatpush1.msra.mxu0 0.0
    %1576 = vmatprep.subr.mxu0 0.0
    %1577 = vmatpush1.msra.mxu0 0.0
    %1578 = vmatprep.subr.mxu0 0.0
    %1579 = vmatpush1.msra.mxu0 0.0
    %1580 = vmatprep.subr.mxu0 0.0
    %1581 = vmatpush1.msra.mxu0 0.0
    %1582 = vmatprep.subr.mxu0 0.0
    %1583 = vmatpush1.msra.mxu0 0.0
    %1584 = vmatprep.subr.mxu0 0.0
    %1585 = vmatpush1.msra.mxu0 0.0
    %1586 = vmatprep.subr.mxu0 0.0
    %1587 = vmatpush1.msra.mxu0 0.0
    %1588 = vmatprep.subr.mxu0 0.0
    %1589 = vmatpush1.msra.mxu0 0.0
    %1590 = vmatprep.subr.mxu0 0.0
    %1591 = vmatpush1.msra.mxu0 0.0
    %1592 = vmatprep.subr.mxu0 0.0
    %1593 = vmatpush1.msra.mxu0 0.0
    %1594 = vmatprep.subr.mxu0 0.0
    %1595 = vmatpush1.msra.mxu0 0.0
    %1596 = vmatprep.subr.mxu0 0.0
    %1597 = vmatpush1.msra.mxu0 %v204
    %1598 = vmatprep.subr.mxu0 0.0
    %1599 = vmatpush1.msra.mxu0 %v203
    %1600 = vmatprep.subr.mxu0 0.0
    %1601 = vmatpush1.msra.mxu0 %v202
    %1602 = vmatprep.subr.mxu0 0.0
    %1603 = vmatpush1.msra.mxu0 %v201
    %1604 = vmatprep.subr.mxu0 0.0
    %1605 = vmatpush2.msra.mxu0 0.0
    %1606 = vmatprep.subr.mxu0 0.0
    %1607 = vmatpush2.msra.mxu0 0.0
    %1608 = vmatprep.subr.mxu0 0.0
    %1609 = vmatpush2.msra.mxu0 0.0
    %1610 = vmatprep.subr.mxu0 0.0
    %1611 = vmatpush2.msra.mxu0 0.0
    %1612 = vmatprep.subr.mxu0 0.0
    %1613 = vmatpush2.msra.mxu0 0.0
    %1614 = vmatprep.subr.mxu0 0.0
    %1615 = vmatpush2.msra.mxu0 0.0
    %1616 = vmatprep.subr.mxu0 0.0
    %1617 = vmatpush2.msra.mxu0 0.0
    %1618 = vmatprep.subr.mxu0 0.0
    %1619 = vmatpush2.msra.mxu0 0.0
    %1620 = vmatprep.subr.mxu0 0.0
    %1621 = vmatpush2.msra.mxu0 0.0
    %1622 = vmatprep.subr.mxu0 0.0
    %1623 = vmatpush2.msra.mxu0 0.0
    %1624 = vmatprep.subr.mxu0 0.0
    %1625 = vmatpush2.msra.mxu0 0.0
    %1626 = vmatprep.subr.mxu0 0.0
    %1627 = vmatpush2.msra.mxu0 0.0
    %1628 = vmatprep.subr.mxu0 0.0
    %1629 = vmatpush2.msra.mxu0 0.0
    %1630 = vmatprep.subr.mxu0 0.0
    %1631 = vmatpush2.msra.mxu0 0.0
    %1632 = vmatprep.subr.mxu0 0.0
    %1633 = vmatpush2.msra.mxu0 0.0
    %1634 = vmatprep.subr.mxu0 0.0
    %1635 = vmatpush2.msra.mxu0 0.0
    %1636 = vmatprep.mubr.f32.mxu0 0.0
    %1637 = vmatmul.mubr.f32.gmra.mxu0 %v1399
    %v1638 = vpop.f32.mrf.mxu0
    %v1639 = vadd.f32 0.0, %v1638
    %v1640 = vpop.f32.mrf.mxu0
    %1641 = vdwg.mxu0
    %v1642 = vadd.f32 %v1571, %v1639
    %v1643 = vxor.u32 %v1642, 2147483648
    %v1644 = vmul.f32 %v1643, 1.442695
    %v1645 = vpow.pop %v1644
    %v1646 = vadd.f32 %v1645, 1.0
    %v1647 = vrcp.pop %v1646
    %v1648 = vmul.f32 1.0, %v1647
    %v1649 = vtanh.pop %v1642
    %v1650 = vmul.f32 %v1648, %v1389
    %1652 = vrot.lane.b32.xlu0 %v1649, 64
    %v1653 = vpop.permute.xlu0 %1652
    %v1655 = vmul.f32 %v1648, %v1653
    %1657 = vrot.lane.b32.xlu0 %v1655, 32
    %v1658 = vpop.permute.xlu0 %1657
    %v1660 = vadd.f32 %v1650, %v1658
    %v1661 = vtanh.pop %v1660
    %1663 = vrot.lane.b32.xlu0 %v1661, 64
    %v1664 = vpop.permute.xlu0 %1663
    %v1666 = vmul.f32 %v1648, %v1664
    %1668 = vrot.lane.b32.xlu0 %v1666, 32
    %v1669 = vpop.permute.xlu0 %1668
    %v1670 = vsel %vm109, %v1669, 0
    %1672 = vmatprep.subr.mxu0 0.0
    %1673 = vmatpush1.msra.mxu0 0.0
    %1674 = vmatprep.subr.mxu0 0.0
    %1675 = vmatpush1.msra.mxu0 0.0
    %1676 = vmatprep.subr.mxu0 0.0
    %1677 = vmatpush1.msra.mxu0 0.0
    %1678 = vmatprep.subr.mxu0 0.0
    %1679 = vmatpush1.msra.mxu0 0.0
    %1680 = vmatprep.subr.mxu0 0.0
    %1681 = vmatpush1.msra.mxu0 0.0
    %1682 = vmatprep.subr.mxu0 0.0
    %1683 = vmatpush1.msra.mxu0 0.0
    %1684 = vmatprep.subr.mxu0 0.0
    %1685 = vmatpush1.msra.mxu0 0.0
    %1686 = vmatprep.subr.mxu0 0.0
    %1687 = vmatpush1.msra.mxu0 0.0
    %1688 = vmatprep.subr.mxu0 0.0
    %1689 = vmatpush1.msra.mxu0 0.0
    %1690 = vmatprep.subr.mxu0 0.0
    %1691 = vmatpush1.msra.mxu0 0.0
    %1692 = vmatprep.subr.mxu0 0.0
    %1693 = vmatpush1.msra.mxu0 0.0
    %1694 = vmatprep.subr.mxu0 0.0
    %1695 = vmatpush1.msra.mxu0 0.0
    %1696 = vmatprep.subr.mxu0 0.0
    %1697 = vmatpush1.msra.mxu0 %v98
    %1698 = vmatprep.subr.mxu0 0.0
    %1699 = vmatpush1.msra.mxu0 %v97
    %1700 = vmatprep.subr.mxu0 0.0
    %1701 = vmatpush1.msra.mxu0 %v96
    %1702 = vmatprep.subr.mxu0 0.0
    %1703 = vmatpush1.msra.mxu0 %v95
    %1704 = vmatprep.subr.mxu0 0.0
    %1705 = vmatpush2.msra.mxu0 0.0
    %1706 = vmatprep.subr.mxu0 0.0
    %1707 = vmatpush2.msra.mxu0 0.0
    %1708 = vmatprep.subr.mxu0 0.0
    %1709 = vmatpush2.msra.mxu0 0.0
    %1710 = vmatprep.subr.mxu0 0.0
    %1711 = vmatpush2.msra.mxu0 0.0
    %1712 = vmatprep.subr.mxu0 0.0
    %1713 = vmatpush2.msra.mxu0 0.0
    %1714 = vmatprep.subr.mxu0 0.0
    %1715 = vmatpush2.msra.mxu0 0.0
    %1716 = vmatprep.subr.mxu0 0.0
    %1717 = vmatpush2.msra.mxu0 0.0
    %1718 = vmatprep.subr.mxu0 0.0
    %1719 = vmatpush2.msra.mxu0 0.0
    %1720 = vmatprep.subr.mxu0 0.0
    %1721 = vmatpush2.msra.mxu0 0.0
    %1722 = vmatprep.subr.mxu0 0.0
    %1723 = vmatpush2.msra.mxu0 0.0
    %1724 = vmatprep.subr.mxu0 0.0
    %1725 = vmatpush2.msra.mxu0 0.0
    %1726 = vmatprep.subr.mxu0 0.0
    %1727 = vmatpush2.msra.mxu0 0.0
    %1728 = vmatprep.subr.mxu0 0.0
    %1729 = vmatpush2.msra.mxu0 0.0
    %1730 = vmatprep.subr.mxu0 0.0
    %1731 = vmatpush2.msra.mxu0 0.0
    %1732 = vmatprep.subr.mxu0 0.0
    %1733 = vmatpush2.msra.mxu0 0.0
    %1734 = vmatprep.subr.mxu0 0.0
    %1735 = vmatpush2.msra.mxu0 0.0
    %1736 = vmatprep.mubr.f32.mxu0 0.0
    %1737 = vmatmul.mubr.f32.gmra.mxu0 %v1670
    %v1738 = vpop.f32.mrf.mxu0
    %v1739 = vadd.f32 %v104, %v1738
    %v1740 = vpop.f32.mrf.mxu0
    %1741 = vdwg.mxu0
    %1743 = vrot.lane.b32.xlu0 %v1570, 32
    %v1744 = vpop.permute.xlu0 %1743
    %v1745 = vsel %vm109, %v1744, 0
    %1747 = vmatprep.subr.mxu0 0.0
    %1748 = vmatpush1.msra.mxu0 0.0
    %1749 = vmatprep.subr.mxu0 0.0
    %1750 = vmatpush1.msra.mxu0 0.0
    %1751 = vmatprep.subr.mxu0 0.0
    %1752 = vmatpush1.msra.mxu0 0.0
    %1753 = vmatprep.subr.mxu0 0.0
    %1754 = vmatpush1.msra.mxu0 0.0
    %1755 = vmatprep.subr.mxu0 0.0
    %1756 = vmatpush1.msra.mxu0 0.0
    %1757 = vmatprep.subr.mxu0 0.0
    %1758 = vmatpush1.msra.mxu0 0.0
    %1759 = vmatprep.subr.mxu0 0.0
    %1760 = vmatpush1.msra.mxu0 0.0
    %1761 = vmatprep.subr.mxu0 0.0
    %1762 = vmatpush1.msra.mxu0 0.0
    %1763 = vmatprep.subr.mxu0 0.0
    %1764 = vmatpush1.msra.mxu0 0.0
    %1765 = vmatprep.subr.mxu0 0.0
    %1766 = vmatpush1.msra.mxu0 0.0
    %1767 = vmatprep.subr.mxu0 0.0
    %1768 = vmatpush1.msra.mxu0 0.0
    %1769 = vmatprep.subr.mxu0 0.0
    %1770 = vmatpush1.msra.mxu0 0.0
    %1771 = vmatprep.subr.mxu0 0.0
    %1772 = vmatpush1.msra.mxu0 %v382
    %1773 = vmatprep.subr.mxu0 0.0
    %1774 = vmatpush1.msra.mxu0 %v381
    %1775 = vmatprep.subr.mxu0 0.0
    %1776 = vmatpush1.msra.mxu0 %v380
    %1777 = vmatprep.subr.mxu0 0.0
    %1778 = vmatpush1.msra.mxu0 %v379
    %1779 = vmatprep.subr.mxu0 0.0
    %1780 = vmatpush2.msra.mxu0 0.0
    %1781 = vmatprep.subr.mxu0 0.0
    %1782 = vmatpush2.msra.mxu0 0.0
    %1783 = vmatprep.subr.mxu0 0.0
    %1784 = vmatpush2.msra.mxu0 0.0
    %1785 = vmatprep.subr.mxu0 0.0
    %1786 = vmatpush2.msra.mxu0 0.0
    %1787 = vmatprep.subr.mxu0 0.0
    %1788 = vmatpush2.msra.mxu0 0.0
    %1789 = vmatprep.subr.mxu0 0.0
    %1790 = vmatpush2.msra.mxu0 0.0
    %1791 = vmatprep.subr.mxu0 0.0
    %1792 = vmatpush2.msra.mxu0 0.0
    %1793 = vmatprep.subr.mxu0 0.0
    %1794 = vmatpush2.msra.mxu0 0.0
    %1795 = vmatprep.subr.mxu0 0.0
    %1796 = vmatpush2.msra.mxu0 0.0
    %1797 = vmatprep.subr.mxu0 0.0
    %1798 = vmatpush2.msra.mxu0 0.0
    %1799 = vmatprep.subr.mxu0 0.0
    %1800 = vmatpush2.msra.mxu0 0.0
    %1801 = vmatprep.subr.mxu0 0.0
    %1802 = vmatpush2.msra.mxu0 0.0
    %1803 = vmatprep.subr.mxu0 0.0
    %1804 = vmatpush2.msra.mxu0 0.0
    %1805 = vmatprep.subr.mxu0 0.0
    %1806 = vmatpush2.msra.mxu0 0.0
    %1807 = vmatprep.subr.mxu0 0.0
    %1808 = vmatpush2.msra.mxu0 0.0
    %1809 = vmatprep.subr.mxu0 0.0
    %1810 = vmatpush2.msra.mxu0 0.0
    %1811 = vmatprep.mubr.f32.mxu0 0.0
    %1812 = vmatmul.mubr.f32.gmra.mxu0 %v1745
    %v1813 = vpop.f32.mrf.mxu0
    %v1814 = vadd.f32 0.0, %v1813
    %v1815 = vpop.f32.mrf.mxu0
    %1816 = vdwg.mxu0
    %v1817 = vadd.f32 %v1739, %v1814
    %v1818 = vxor.u32 %v1817, 2147483648
    %v1819 = vmul.f32 %v1818, 1.442695
    %v1820 = vpow.pop %v1819
    %v1821 = vadd.f32 %v1820, 1.0
    %v1822 = vrcp.pop %v1821
    %v1823 = vmul.f32 1.0, %v1822
    %v1824 = vtanh.pop %v1817
    %v1825 = vmul.f32 %v1823, %v1564
    %1827 = vrot.lane.b32.xlu0 %v1824, 64
    %v1828 = vpop.permute.xlu0 %1827
    %v1830 = vmul.f32 %v1823, %v1828
    %1832 = vrot.lane.b32.xlu0 %v1830, 32
    %v1833 = vpop.permute.xlu0 %1832
    %v1835 = vadd.f32 %v1825, %v1833
    %v1836 = vtanh.pop %v1835
    %1838 = vrot.lane.b32.xlu0 %v1836, 64
    %v1839 = vpop.permute.xlu0 %1838
    %v1841 = vmul.f32 %v1823, %v1839
    %v1842 = vld [vmem:[#allocation2 + $0x38] sm:$0xff]
    %1843 = vmatprep.subr.mxu0 0.0
    %1844 = vmatpush1.msra.mxu0 0.0
    %1845 = vmatprep.subr.mxu0 0.0
    %1846 = vmatpush1.msra.mxu0 0.0
    %1847 = vmatprep.subr.mxu0 0.0
    %1848 = vmatpush1.msra.mxu0 0.0
    %1849 = vmatprep.subr.mxu0 0.0
    %1850 = vmatpush1.msra.mxu0 0.0
    %1851 = vmatprep.subr.mxu0 0.0
    %1852 = vmatpush1.msra.mxu0 0.0
    %1853 = vmatprep.subr.mxu0 0.0
    %1854 = vmatpush1.msra.mxu0 0.0
    %1855 = vmatprep.subr.mxu0 0.0
    %1856 = vmatpush1.msra.mxu0 0.0
    %1857 = vmatprep.subr.mxu0 0.0
    %1858 = vmatpush1.msra.mxu0 0.0
    %1859 = vmatprep.subr.mxu0 0.0
    %1860 = vmatpush1.msra.mxu0 0.0
    %1861 = vmatprep.subr.mxu0 0.0
    %1862 = vmatpush1.msra.mxu0 0.0
    %1863 = vmatprep.subr.mxu0 0.0
    %1864 = vmatpush1.msra.mxu0 0.0
    %1865 = vmatprep.subr.mxu0 0.0
    %1866 = vmatpush1.msra.mxu0 0.0
    %1867 = vmatprep.subr.mxu0 0.0
    %1868 = vmatpush1.msra.mxu0 %v204
    %1869 = vmatprep.subr.mxu0 0.0
    %1870 = vmatpush1.msra.mxu0 %v203
    %1871 = vmatprep.subr.mxu0 0.0
    %1872 = vmatpush1.msra.mxu0 %v202
    %1873 = vmatprep.subr.mxu0 0.0
    %1874 = vmatpush1.msra.mxu0 %v201
    %1875 = vmatprep.subr.mxu0 0.0
    %1876 = vmatpush2.msra.mxu0 0.0
    %1877 = vmatprep.subr.mxu0 0.0
    %1878 = vmatpush2.msra.mxu0 0.0
    %1879 = vmatprep.subr.mxu0 0.0
    %1880 = vmatpush2.msra.mxu0 0.0
    %1881 = vmatprep.subr.mxu0 0.0
    %1882 = vmatpush2.msra.mxu0 0.0
    %1883 = vmatprep.subr.mxu0 0.0
    %1884 = vmatpush2.msra.mxu0 0.0
    %1885 = vmatprep.subr.mxu0 0.0
    %1886 = vmatpush2.msra.mxu0 0.0
    %1887 = vmatprep.subr.mxu0 0.0
    %1888 = vmatpush2.msra.mxu0 0.0
    %1889 = vmatprep.subr.mxu0 0.0
    %1890 = vmatpush2.msra.mxu0 0.0
    %1891 = vmatprep.subr.mxu0 0.0
    %1892 = vmatpush2.msra.mxu0 0.0
    %1893 = vmatprep.subr.mxu0 0.0
    %1894 = vmatpush2.msra.mxu0 0.0
    %1895 = vmatprep.subr.mxu0 0.0
    %1896 = vmatpush2.msra.mxu0 0.0
    %1897 = vmatprep.subr.mxu0 0.0
    %1898 = vmatpush2.msra.mxu0 0.0
    %1899 = vmatprep.subr.mxu0 0.0
    %1900 = vmatpush2.msra.mxu0 0.0
    %1901 = vmatprep.subr.mxu0 0.0
    %1902 = vmatpush2.msra.mxu0 0.0
    %1903 = vmatprep.subr.mxu0 0.0
    %1904 = vmatpush2.msra.mxu0 0.0
    %1905 = vmatprep.subr.mxu0 0.0
    %1906 = vmatpush2.msra.mxu0 0.0
    %1907 = vmatprep.mubr.f32.mxu0 0.0
    %1908 = vmatmul.mubr.f32.gmra.mxu0 %v1670
    %v1909 = vpop.f32.mrf.mxu0
    %v1910 = vadd.f32 0.0, %v1909
    %v1911 = vpop.f32.mrf.mxu0
    %1912 = vdwg.mxu0
    %v1913 = vadd.f32 %v1842, %v1910
    %v1914 = vxor.u32 %v1913, 2147483648
    %v1915 = vmul.f32 %v1914, 1.442695
    %v1916 = vpow.pop %v1915
    %v1917 = vadd.f32 %v1916, 1.0
    %v1918 = vrcp.pop %v1917
    %v1919 = vmul.f32 1.0, %v1918
    %v1920 = vtanh.pop %v1913
    %v1921 = vmul.f32 %v1919, %v1660
    %1923 = vrot.lane.b32.xlu0 %v1920, 64
    %v1924 = vpop.permute.xlu0 %1923
    %v1926 = vmul.f32 %v1919, %v1924
    %1928 = vrot.lane.b32.xlu0 %v1926, 32
    %v1929 = vpop.permute.xlu0 %1928
    %v1931 = vadd.f32 %v1921, %v1929
    %v1932 = vtanh.pop %v1931
    %1934 = vrot.lane.b32.xlu0 %v1932, 64
    %v1935 = vpop.permute.xlu0 %1934
    %v1937 = vmul.f32 %v1919, %v1935
    %1939 = vrot.lane.b32.xlu0 %v1937, 32
    %v1940 = vpop.permute.xlu0 %1939
    %v1941 = vsel %vm109, %v1940, 0
    %1943 = vmatprep.subr.mxu0 0.0
    %1944 = vmatpush1.msra.mxu0 0.0
    %1945 = vmatprep.subr.mxu0 0.0
    %1946 = vmatpush1.msra.mxu0 0.0
    %1947 = vmatprep.subr.mxu0 0.0
    %1948 = vmatpush1.msra.mxu0 0.0
    %1949 = vmatprep.subr.mxu0 0.0
    %1950 = vmatpush1.msra.mxu0 0.0
    %1951 = vmatprep.subr.mxu0 0.0
    %1952 = vmatpush1.msra.mxu0 0.0
    %1953 = vmatprep.subr.mxu0 0.0
    %1954 = vmatpush1.msra.mxu0 0.0
    %1955 = vmatprep.subr.mxu0 0.0
    %1956 = vmatpush1.msra.mxu0 0.0
    %1957 = vmatprep.subr.mxu0 0.0
    %1958 = vmatpush1.msra.mxu0 0.0
    %1959 = vmatprep.subr.mxu0 0.0
    %1960 = vmatpush1.msra.mxu0 0.0
    %1961 = vmatprep.subr.mxu0 0.0
    %1962 = vmatpush1.msra.mxu0 0.0
    %1963 = vmatprep.subr.mxu0 0.0
    %1964 = vmatpush1.msra.mxu0 0.0
    %1965 = vmatprep.subr.mxu0 0.0
    %1966 = vmatpush1.msra.mxu0 0.0
    %1967 = vmatprep.subr.mxu0 0.0
    %1968 = vmatpush1.msra.mxu0 %v98
    %1969 = vmatprep.subr.mxu0 0.0
    %1970 = vmatpush1.msra.mxu0 %v97
    %1971 = vmatprep.subr.mxu0 0.0
    %1972 = vmatpush1.msra.mxu0 %v96
    %1973 = vmatprep.subr.mxu0 0.0
    %1974 = vmatpush1.msra.mxu0 %v95
    %1975 = vmatprep.subr.mxu0 0.0
    %1976 = vmatpush2.msra.mxu0 0.0
    %1977 = vmatprep.subr.mxu0 0.0
    %1978 = vmatpush2.msra.mxu0 0.0
    %1979 = vmatprep.subr.mxu0 0.0
    %1980 = vmatpush2.msra.mxu0 0.0
    %1981 = vmatprep.subr.mxu0 0.0
    %1982 = vmatpush2.msra.mxu0 0.0
    %1983 = vmatprep.subr.mxu0 0.0
    %1984 = vmatpush2.msra.mxu0 0.0
    %1985 = vmatprep.subr.mxu0 0.0
    %1986 = vmatpush2.msra.mxu0 0.0
    %1987 = vmatprep.subr.mxu0 0.0
    %1988 = vmatpush2.msra.mxu0 0.0
    %1989 = vmatprep.subr.mxu0 0.0
    %1990 = vmatpush2.msra.mxu0 0.0
    %1991 = vmatprep.subr.mxu0 0.0
    %1992 = vmatpush2.msra.mxu0 0.0
    %1993 = vmatprep.subr.mxu0 0.0
    %1994 = vmatpush2.msra.mxu0 0.0
    %1995 = vmatprep.subr.mxu0 0.0
    %1996 = vmatpush2.msra.mxu0 0.0
    %1997 = vmatprep.subr.mxu0 0.0
    %1998 = vmatpush2.msra.mxu0 0.0
    %1999 = vmatprep.subr.mxu0 0.0
    %2000 = vmatpush2.msra.mxu0 0.0
    %2001 = vmatprep.subr.mxu0 0.0
    %2002 = vmatpush2.msra.mxu0 0.0
    %2003 = vmatprep.subr.mxu0 0.0
    %2004 = vmatpush2.msra.mxu0 0.0
    %2005 = vmatprep.subr.mxu0 0.0
    %2006 = vmatpush2.msra.mxu0 0.0
    %2007 = vmatprep.mubr.f32.mxu0 0.0
    %2008 = vmatmul.mubr.f32.gmra.mxu0 %v1941
    %v2009 = vpop.f32.mrf.mxu0
    %v2010 = vadd.f32 %v104, %v2009
    %v2011 = vpop.f32.mrf.mxu0
    %2012 = vdwg.mxu0
    %2014 = vrot.lane.b32.xlu0 %v1841, 32
    %v2015 = vpop.permute.xlu0 %2014
    %v2016 = vsel %vm109, %v2015, 0
    %2018 = vmatprep.subr.mxu0 0.0
    %2019 = vmatpush1.msra.mxu0 0.0
    %2020 = vmatprep.subr.mxu0 0.0
    %2021 = vmatpush1.msra.mxu0 0.0
    %2022 = vmatprep.subr.mxu0 0.0
    %2023 = vmatpush1.msra.mxu0 0.0
    %2024 = vmatprep.subr.mxu0 0.0
    %2025 = vmatpush1.msra.mxu0 0.0
    %2026 = vmatprep.subr.mxu0 0.0
    %2027 = vmatpush1.msra.mxu0 0.0
    %2028 = vmatprep.subr.mxu0 0.0
    %2029 = vmatpush1.msra.mxu0 0.0
    %2030 = vmatprep.subr.mxu0 0.0
    %2031 = vmatpush1.msra.mxu0 0.0
    %2032 = vmatprep.subr.mxu0 0.0
    %2033 = vmatpush1.msra.mxu0 0.0
    %2034 = vmatprep.subr.mxu0 0.0
    %2035 = vmatpush1.msra.mxu0 0.0
    %2036 = vmatprep.subr.mxu0 0.0
    %2037 = vmatpush1.msra.mxu0 0.0
    %2038 = vmatprep.subr.mxu0 0.0
    %2039 = vmatpush1.msra.mxu0 0.0
    %2040 = vmatprep.subr.mxu0 0.0
    %2041 = vmatpush1.msra.mxu0 0.0
    %2042 = vmatprep.subr.mxu0 0.0
    %2043 = vmatpush1.msra.mxu0 %v382
    %2044 = vmatprep.subr.mxu0 0.0
    %2045 = vmatpush1.msra.mxu0 %v381
    %2046 = vmatprep.subr.mxu0 0.0
    %2047 = vmatpush1.msra.mxu0 %v380
    %2048 = vmatprep.subr.mxu0 0.0
    %2049 = vmatpush1.msra.mxu0 %v379
    %2050 = vmatprep.subr.mxu0 0.0
    %2051 = vmatpush2.msra.mxu0 0.0
    %2052 = vmatprep.subr.mxu0 0.0
    %2053 = vmatpush2.msra.mxu0 0.0
    %2054 = vmatprep.subr.mxu0 0.0
    %2055 = vmatpush2.msra.mxu0 0.0
    %2056 = vmatprep.subr.mxu0 0.0
    %2057 = vmatpush2.msra.mxu0 0.0
    %2058 = vmatprep.subr.mxu0 0.0
    %2059 = vmatpush2.msra.mxu0 0.0
    %2060 = vmatprep.subr.mxu0 0.0
    %2061 = vmatpush2.msra.mxu0 0.0
    %2062 = vmatprep.subr.mxu0 0.0
    %2063 = vmatpush2.msra.mxu0 0.0
    %2064 = vmatprep.subr.mxu0 0.0
    %2065 = vmatpush2.msra.mxu0 0.0
    %2066 = vmatprep.subr.mxu0 0.0
    %2067 = vmatpush2.msra.mxu0 0.0
    %2068 = vmatprep.subr.mxu0 0.0
    %2069 = vmatpush2.msra.mxu0 0.0
    %2070 = vmatprep.subr.mxu0 0.0
    %2071 = vmatpush2.msra.mxu0 0.0
    %2072 = vmatprep.subr.mxu0 0.0
    %2073 = vmatpush2.msra.mxu0 0.0
    %2074 = vmatprep.subr.mxu0 0.0
    %2075 = vmatpush2.msra.mxu0 0.0
    %2076 = vmatprep.subr.mxu0 0.0
    %2077 = vmatpush2.msra.mxu0 0.0
    %2078 = vmatprep.subr.mxu0 0.0
    %2079 = vmatpush2.msra.mxu0 0.0
    %2080 = vmatprep.subr.mxu0 0.0
    %2081 = vmatpush2.msra.mxu0 0.0
    %2082 = vmatprep.mubr.f32.mxu0 0.0
    %2083 = vmatmul.mubr.f32.gmra.mxu0 %v2016
    %v2084 = vpop.f32.mrf.mxu0
    %v2085 = vadd.f32 0.0, %v2084
    %v2086 = vpop.f32.mrf.mxu0
    %2087 = vdwg.mxu0
    %v2088 = vadd.f32 %v2010, %v2085
    %v2089 = vxor.u32 %v2088, 2147483648
    %v2090 = vmul.f32 %v2089, 1.442695
    %v2091 = vpow.pop %v2090
    %v2092 = vadd.f32 %v2091, 1.0
    %v2093 = vrcp.pop %v2092
    %v2094 = vmul.f32 1.0, %v2093
    %v2095 = vtanh.pop %v2088
    %v2096 = vmul.f32 %v2094, %v1835
    %2098 = vrot.lane.b32.xlu0 %v2095, 64
    %v2099 = vpop.permute.xlu0 %2098
    %v2101 = vmul.f32 %v2094, %v2099
    %2103 = vrot.lane.b32.xlu0 %v2101, 32
    %v2104 = vpop.permute.xlu0 %2103
    %v2106 = vadd.f32 %v2096, %v2104
    %v2107 = vtanh.pop %v2106
    %2109 = vrot.lane.b32.xlu0 %v2107, 64
    %v2110 = vpop.permute.xlu0 %2109
    %v2112 = vmul.f32 %v2094, %v2110
    %2114 = vrot.lane.b32.xlu0 %v2112, 32
    %v2115 = vpop.permute.xlu0 %2114
    %2117 = vst.msk [vmem:[#allocation10] sm:$0xff] %vm109, %v2115
    // Predicated region
    $region38: #{tpu_custom_call.1} parent=1 // pred_check
      _
    $region39: #{tpu_custom_call.1} parent=1 // pred_check_branch
      %2119 = sbr.rel (0) target = $region41
    $region40: #{tpu_custom_call.1} parent=1 // pred_region
      %s2121 = ssub.s32 128, 128
      %2122 = vsyncadd [#allocation4], %s2121
      %s2124 = sshll.u32 [#allocation10], 4
      %s2125 = int_to_ptr.vmem [resolvable:$true] %s2124
      %2127 = dma.vmem_to_hbm [thread:$0]  %s2125, 128, %s5, [#allocation4]
    $region41: #{tpu_custom_call.1} parent=1 // pred_fallthru
      _
    // Predicated region
    $region42: #{tpu_custom_call.1} parent=1 // pred_check
      _
    $region43: #{tpu_custom_call.1} parent=1 // pred_check_branch
      %2129 = sbr.rel (0) target = $region45
    $region44: #{tpu_custom_call.1} parent=1 // pred_region
      %2130 = dma.done [#allocation4], 128
    $region45: #{tpu_custom_call.1} parent=1 // pred_fallthru
      _
    %2131 = vsyncpa [#allocation3], 1
    %2132 = vsyncpa [#allocation6], 1
    %2133 = vsyncpa [#allocation9], 1
    %2134 = vsyncpa [#allocation4], 1

</llo_original>
